<compile_context>
chip_gen: v7x
topology: tpu7x:2x2x1
jax: 0.10.0
libtpu: 0.0.40
codegen_flags: <defaults>
</compile_context>

<pallas_src>
import functools

import jax
import jax.numpy as jnp
from jax.experimental import pallas as pl
from jax.experimental.pallas import tpu as pltpu


def _tap_offsets():
    """Distinct (dy, dx) offsets, in padded-slab coordinates, used by the three
    conv branches (pointwise = (2,2); ordinary 3x3 = {1,2,3}^2; dilated = {0,2,4}^2)."""
    offs = []
    for dy in range(5):
        for dx in range(5):
            ordinary = (1 <= dy <= 3) and (1 <= dx <= 3)
            dilated = (dy % 2 == 0) and (dx % 2 == 0)
            if ordinary or dilated:
                offs.append((dy, dx))
    return tuple(offs)


TAP_OFFSETS = _tap_offsets()
NUM_TAPS = len(TAP_OFFSETS)          # 17


def msag_kernel(body_ref, halo_ref, wpack_ref, bpack_ref, wv_ref, bv_ref,
                out_ref, slab_ref, patch_ref):
    # body_ref : (1, tH, W+4, C)   padded rows [j*tH, j*tH+tH)
    # halo_ref : (1, 4,  W+4, C)   padded rows [j*tH+tH, j*tH+tH+4)
    # wpack_ref: (17*C, 3*C)       packed pointwise/ordinary/dilated weights (compute dtype)
    # bpack_ref: (1, 3*C)          packed biases (f32)
    # wv_ref   : (3*C, C)          vote 1x1 conv weights (compute dtype)
    # bv_ref   : (1, C)            vote bias (f32)
    # out_ref  : (1, tH*W, C)      output tile (f32)
    # slab_ref : (tH+4, W+4, C)    f32 scratch: haloed row slab
    # patch_ref: (tH*W, 17*C)      compute-dtype scratch: im2col patch
    tH = body_ref.shape[1]
    Wp = body_ref.shape[2]
    C = wv_ref.shape[1]
    W = Wp - 4
    P = tH * W
    cdt = patch_ref.dtype

    # Assemble the haloed slab once in VMEM.
    slab_ref[0:tH] = body_ref[0]
    slab_ref[tH:tH + 4] = halo_ref[0]

    # Centre (un-padded) pixels in f32 for the residual multiply.
    xc = slab_ref[2:2 + tH, 2:2 + W, :].reshape(P, C)

    # im2col: write every distinct tap once into the (P, 17*C) scratch.
    for k, (dy, dx) in enumerate(TAP_OFFSETS):
        tap = slab_ref[dy:dy + tH, dx:dx + W, :].reshape(P, C)
        patch_ref[:, k * C:(k + 1) * C] = tap.astype(cdt)

    # Fused conv: one MXU matmul (K = 17*C) yields [x1 | x2 | x3], f32 accumulation.
    y = jnp.dot(patch_ref[...], wpack_ref[...],
                preferred_element_type=jnp.float32) + bpack_ref[...]
    r = jnp.maximum(y, 0.0)                                   # relu(cat(x1,x2,x3))

    # Vote 1x1 conv (K = 3*C) + sigmoid.
    v = jnp.dot(r.astype(cdt), wv_ref[...],
                preferred_element_type=jnp.float32) + bv_ref[...]
    att = pl.reciprocal(1.0 + jnp.exp(-v), approx=True)       # sigmoid via EUP

    out_ref[0] = xc * (1.0 + att)                              # x + x * att


def pack_msag_params(params, compute_dtype=jnp.bfloat16):
    """Pack the folded per-branch conv weights into the fused-kernel layout."""
    w1, b1, w2, b2, w3, b3, wv, bv = params
    C = w1.shape[0]
    blocks = []
    for (dy, dx) in TAP_OFFSETS:
        blk = jnp.zeros((C, 3 * C), jnp.float32)
        if (dy, dx) == (2, 2):
            blk = blk.at[:, 0:C].set(w1)                              # pointwise 1x1
        if 1 <= dy <= 3 and 1 <= dx <= 3:
            blk = blk.at[:, C:2 * C].set(w2[dy - 1, dx - 1])          # ordinary 3x3
        if dy % 2 == 0 and dx % 2 == 0:
            blk = blk.at[:, 2 * C:3 * C].set(w3[dy // 2, dx // 2])    # dilated 3x3
        blocks.append(blk)
    wpack = jnp.concatenate(blocks, axis=0).astype(compute_dtype)     # (17C, 3C)
    bpack = jnp.concatenate([b1, b2, b3]).reshape(1, 3 * C).astype(jnp.float32)
    wvp = wv.astype(compute_dtype)                                    # (3C, C)
    bvp = bv.reshape(1, C).astype(jnp.float32)
    return wpack, bpack, wvp, bvp


def _pick_block_rows(H, W, C, cd_bytes):
    """Largest row tile (multiple of 8 dividing H, or H itself) within a VMEM budget."""
    per_row = 2 * (W + 4) * C * 4 + W * C * (NUM_TAPS * cd_bytes + 10 * 4)
    budget = 4 * 1024 * 1024
    cands = [r for r in range(8, H + 1, 8) if H % r == 0]
    if H % 4 == 0 and H not in cands:
        cands.append(H)           # single-tile fallback is always legal
    cands.sort()
    fitting = [r for r in cands if r * per_row <= budget]
    return fitting[-1] if fitting else cands[0]


def msag_forward(x_nchw, packed_params, *, block_rows=None):
    N, C, H, W = x_nchw.shape
    wpack, bpack, wvp, bvp = packed_params
    K = wpack.shape[0]
    assert K == NUM_TAPS * C
    compute_dtype = wpack.dtype
    cd_bytes = jnp.dtype(compute_dtype).itemsize

    assert H % 4 == 0, "H must be a multiple of 4 for the halo tiling"
    tH = block_rows if block_rows is not None else _pick_block_rows(H, W, C, cd_bytes)
    assert H % tH == 0 and tH % 4 == 0 and (tH % 8 == 0 or tH == H), (
        "block_rows must divide H, be a multiple of 4, and be a multiple of 8 "
        "(or equal to H)")

    Wp = W + 4
    P = tH * W
    grid = (N, H // tH)

    x = jnp.transpose(x_nchw, (0, 2, 3, 1))                    # NHWC
    xp = jnp.pad(x, ((0, 0), (2, 2), (2, 2), (0, 0)))          # (N, H+4, W+4, C)

    in_specs = [
        # body rows of the tile: padded rows [j*tH, j*tH + tH)
        pl.BlockSpec((1, tH, Wp, C), lambda n, j: (n, j, 0, 0)),
        # 4-row halo: padded rows [j*tH + tH, j*tH + tH + 4)
        pl.BlockSpec((1, 4, Wp, C), lambda n, j: (n, (j + 1) * (tH // 4), 0, 0)),
        pl.BlockSpec((K, 3 * C), lambda n, j: (0, 0)),
        pl.BlockSpec((1, 3 * C), lambda n, j: (0, 0)),
        pl.BlockSpec((3 * C, C), lambda n, j: (0, 0)),
        pl.BlockSpec((1, C), lambda n, j: (0, 0)),
    ]
    out_specs = pl.BlockSpec((1, P, C), lambda n, j: (n, j, 0))

    # VMEM budget derived from the actual per-tile buffers (double-buffered I/O,
    # resident weights, scratch slab + im2col, f32 intermediates), with margin.
    est = (2 * (tH * Wp * C * 4 + 4 * Wp * C * 4)
           + 2 * P * C * 4
           + 2 * ((wpack.size + wvp.size) * cd_bytes + (bpack.size + bvp.size) * 4)
           + (tH + 4) * Wp * C * 4 + P * K * cd_bytes
           + 8 * P * C * 4 + 4 * P * 3 * C * 4)
    vmem_limit = int(min(64 * 2 ** 20, max(32 * 2 ** 20, 4 * est)))

    cost = pl.CostEstimate(
        flops=int(2 * N * H * W * (K * 3 * C + 3 * C * C) + 6 * N * H * W * C),
        transcendentals=int(N * H * W * C),
        bytes_accessed=int(xp.size * 4 + N * H * W * C * 4
                           + (wpack.size + wvp.size) * cd_bytes
                           + (bpack.size + bvp.size) * 4),
    )

    out_flat = pl.pallas_call(
        msag_kernel,
        out_shape=jax.ShapeDtypeStruct((N, H * W, C), jnp.float32),
        grid=grid,
        in_specs=in_specs,
        out_specs=out_specs,
        scratch_shapes=[
            pltpu.VMEM((tH + 4, Wp, C), jnp.float32),     # haloed slab
            pltpu.VMEM((P, K), compute_dtype),            # im2col patch
        ],
        compiler_params=pltpu.CompilerParams(
            dimension_semantics=("parallel", "parallel"),
            vmem_limit_bytes=vmem_limit,
        ),
        cost_estimate=cost,
    )(xp, xp, wpack, bpack, wvp, bvp)

    out = out_flat.reshape(N, H, W, C)
    return jnp.transpose(out, (0, 3, 1, 2))                    # back to NCHW


def init_params(key, C):
    """Deterministic synthetic params; conv+BN folded (eval-mode BN)."""
    eps = 1e-5
    ks = jax.random.split(key, 12)

    def bn(k):
        k1, k2, k3, k4 = jax.random.split(k, 4)
        gamma = 1.0 + 0.1 * jax.random.normal(k1, (C,))
        beta = 0.1 * jax.random.normal(k2, (C,))
        mean = 0.1 * jax.random.normal(k3, (C,))
        var = 1.0 + 0.2 * jax.random.uniform(k4, (C,))
        return gamma, beta, mean, var

    def fold(w, b, bn_p):
        gamma, beta, mean, var = bn_p
        scale = gamma / jnp.sqrt(var + eps)       # per output channel (last dim)
        return w * scale, (b - mean) * scale + beta

    w1 = 0.3 * jax.random.normal(ks[0], (C, C))               # (C_in, C_out)
    b1 = 0.1 * jax.random.normal(ks[1], (C,))
    w1, b1 = fold(w1, b1, bn(ks[2]))
    w2 = 0.3 * jax.random.normal(ks[3], (3, 3, C, C))         # HWIO
    b2 = 0.1 * jax.random.normal(ks[4], (C,))
    w2, b2 = fold(w2, b2, bn(ks[5]))
    w3 = 0.3 * jax.random.normal(ks[6], (3, 3, C, C))         # HWIO
    b3 = 0.1 * jax.random.normal(ks[7], (C,))
    w3, b3 = fold(w3, b3, bn(ks[8]))
    wv = 0.3 * jax.random.normal(ks[9], (3 * C, C))           # (3*C_in, C_out)
    bv = 0.1 * jax.random.normal(ks[10], (C,))
    wv, bv = fold(wv, bv, bn(ks[11]))

    params = (w1, b1, w2, b2, w3, b3, wv, bv)
    return jax.tree.map(lambda a: a.astype(jnp.float32), params)


def msag_ref(x_nchw, params, compute_dtype=jnp.bfloat16):
    """Pure-JAX reference (lax conv).  Matmul operands are rounded through
    compute_dtype exactly as in the kernel; accumulation stays f32."""
    w1, b1, w2, b2, w3, b3, wv, bv = params
    x = jnp.transpose(x_nchw, (0, 2, 3, 1))
    rnd = lambda a: a.astype(compute_dtype).astype(jnp.float32)
    xq = rnd(x)
    dn = ('NHWC', 'HWIO', 'NHWC')

    def conv(inp, w_hwio, b, pad, dil):
        y = jax.lax.conv_general_dilated(
            inp, w_hwio, (1, 1), [(pad, pad), (pad, pad)],
            rhs_dilation=(dil, dil), dimension_numbers=dn,
            precision=jax.lax.Precision.HIGHEST)
        return y + b.reshape(1, 1, 1, -1)

    C = x.shape[-1]
    x1 = conv(xq, rnd(w1).reshape(1, 1, C, C), b1, 0, 1)
    x2 = conv(xq, rnd(w2), b2, 1, 1)
    x3 = conv(xq, rnd(w3), b3, 2, 2)
    cat = jnp.maximum(jnp.concatenate([x1, x2, x3], axis=-1), 0.0)
    att = jax.nn.sigmoid(conv(rnd(cat), rnd(wv).reshape(1, 1, 3 * C, C), bv, 0, 1))
    out = x * (1.0 + att)
    return jnp.transpose(out, (0, 3, 1, 2))


if __name__ == "__main__":
    key = jax.random.PRNGKey(0)
    kx, kp = jax.random.split(key)

    N, C, H, W = 2, 4, 16, 16
    x = jax.random.normal(kx, (N, C, H, W), dtype=jnp.float32)
    params = init_params(kp, C)

    compute_dtype = jnp.bfloat16                   # MXU-native on v5e/v6e/v7x
    packed = pack_msag_params(params, compute_dtype)

    # block_rows=8 exercises the multi-tile (N, H//tH) grid + halo path.
    fwd = jax.jit(functools.partial(msag_forward, block_rows=8))
    out = jax.block_until_ready(fwd(x, packed))

    ref = msag_ref(x, params, compute_dtype)
    assert out.shape == (N, C, H, W)
    err = float(jnp.max(jnp.abs(out - ref)))
    assert jnp.allclose(out, ref, atol=2e-3, rtol=2e-3), f"max abs err = {err}"

    print("KERNEL_OK")
</pallas_src>

<mosaic_0001>
module attributes {stable_mosaic.version = 11 : i64} {
  func.func @msag_kernel(%arg0: i32, %arg1: i32, %arg2: memref<1x8x20x4xf32, #tpu.memory_space<vmem>>, %arg3: memref<1x4x20x4xf32, #tpu.memory_space<vmem>>, %arg4: memref<68x12xbf16, #tpu.memory_space<vmem>>, %arg5: memref<1x12xf32, #tpu.memory_space<vmem>>, %arg6: memref<12x4xbf16, #tpu.memory_space<vmem>>, %arg7: memref<1x4xf32, #tpu.memory_space<vmem>>, %arg8: memref<1x128x4xf32, #tpu.memory_space<vmem>>, %arg9: memref<12x20x4xf32, #tpu.memory_space<vmem>>, %arg10: memref<128x68xbf16, #tpu.memory_space<vmem>>) attributes {dimension_semantics = [#tpu.dimension_semantics<parallel>, #tpu.dimension_semantics<parallel>], iteration_bounds = array<i64: 2, 2>, scalar_prefetch = 0 : i64, scratch_operands = 2 : i64, tpu.core_type = #tpu.core_type<tc>, window_params = [{transform_indices = @transform_0, window_bounds = array<i64: 1, 8, 20, 4>}, {transform_indices = @transform_1, window_bounds = array<i64: 1, 4, 20, 4>}, {pipeline_mode = #tpu.pipeline_mode<synchronous>, transform_indices = @transform_2, window_bounds = array<i64: 68, 12>}, {pipeline_mode = #tpu.pipeline_mode<synchronous>, transform_indices = @transform_3, window_bounds = array<i64: 1, 12>}, {pipeline_mode = #tpu.pipeline_mode<synchronous>, transform_indices = @transform_4, window_bounds = array<i64: 12, 4>}, {pipeline_mode = #tpu.pipeline_mode<synchronous>, transform_indices = @transform_5, window_bounds = array<i64: 1, 4>}, {transform_indices = @transform_6, window_bounds = array<i64: 1, 128, 4>}]} {
    %c0 = arith.constant 0 : index
    %c0_0 = arith.constant 0 : index
    %c0_1 = arith.constant 0 : index
    %c0_2 = arith.constant 0 : index
    %0 = vector.load %arg2[%c0, %c0_0, %c0_1, %c0_2] : memref<1x8x20x4xf32, #tpu.memory_space<vmem>>, vector<1x8x20x4xf32>
    %1 = vector.shape_cast %0 : vector<1x8x20x4xf32> to vector<8x20x4xf32>
    %c0_3 = arith.constant 0 : index
    %c0_4 = arith.constant 0 : index
    %c0_5 = arith.constant 0 : index
    %2 = vector.load %arg9[%c0_3, %c0_4, %c0_5] : memref<12x20x4xf32, #tpu.memory_space<vmem>>, vector<8x20x4xf32>
    tpu.vector_store %arg9[%c0_3, %c0_4, %c0_5], %1 {strides = array<i32>} : memref<12x20x4xf32, #tpu.memory_space<vmem>>, vector<8x20x4xf32>,
    %c0_6 = arith.constant 0 : index
    %c0_7 = arith.constant 0 : index
    %c0_8 = arith.constant 0 : index
    %c0_9 = arith.constant 0 : index
    %3 = vector.load %arg3[%c0_6, %c0_7, %c0_8, %c0_9] : memref<1x4x20x4xf32, #tpu.memory_space<vmem>>, vector<1x4x20x4xf32>
    %4 = vector.shape_cast %3 : vector<1x4x20x4xf32> to vector<4x20x4xf32>
    %c8 = arith.constant 8 : index
    %c0_10 = arith.constant 0 : index
    %c0_11 = arith.constant 0 : index
    %5 = vector.load %arg9[%c8, %c0_10, %c0_11] : memref<12x20x4xf32, #tpu.memory_space<vmem>>, vector<4x20x4xf32>
    tpu.vector_store %arg9[%c8, %c0_10, %c0_11], %4 {strides = array<i32>} : memref<12x20x4xf32, #tpu.memory_space<vmem>>, vector<4x20x4xf32>,
    %c2 = arith.constant 2 : index
    %c2_12 = arith.constant 2 : index
    %c0_13 = arith.constant 0 : index
    %6 = vector.load %arg9[%c2, %c2_12, %c0_13] : memref<12x20x4xf32, #tpu.memory_space<vmem>>, vector<8x16x4xf32>
    %7 = vector.shape_cast %6 : vector<8x16x4xf32> to vector<128x4xf32>
    %c0_14 = arith.constant 0 : index
    %c0_15 = arith.constant 0 : index
    %c0_16 = arith.constant 0 : index
    %8 = vector.load %arg9[%c0_14, %c0_15, %c0_16] : memref<12x20x4xf32, #tpu.memory_space<vmem>>, vector<8x16x4xf32>
    %9 = vector.shape_cast %8 : vector<8x16x4xf32> to vector<128x4xf32>
    %10 = arith.truncf %9 : vector<128x4xf32> to vector<128x4xbf16>
    %c0_17 = arith.constant 0 : index
    %c0_18 = arith.constant 0 : index
    %11 = vector.load %arg10[%c0_17, %c0_18] : memref<128x68xbf16, #tpu.memory_space<vmem>>, vector<128x4xbf16>
    tpu.vector_store %arg10[%c0_17, %c0_18], %10 {strides = array<i32>} : memref<128x68xbf16, #tpu.memory_space<vmem>>, vector<128x4xbf16>,
    %c0_19 = arith.constant 0 : index
    %c2_20 = arith.constant 2 : index
    %c0_21 = arith.constant 0 : index
    %12 = vector.load %arg9[%c0_19, %c2_20, %c0_21] : memref<12x20x4xf32, #tpu.memory_space<vmem>>, vector<8x16x4xf32>
    %13 = vector.shape_cast %12 : vector<8x16x4xf32> to vector<128x4xf32>
    %14 = arith.truncf %13 : vector<128x4xf32> to vector<128x4xbf16>
    %c0_22 = arith.constant 0 : index
    %c4 = arith.constant 4 : index
    %15 = vector.load %arg10[%c0_22, %c4] : memref<128x68xbf16, #tpu.memory_space<vmem>>, vector<128x4xbf16>
    tpu.vector_store %arg10[%c0_22, %c4], %14 {strides = array<i32>} : memref<128x68xbf16, #tpu.memory_space<vmem>>, vector<128x4xbf16>,
    %c0_23 = arith.constant 0 : index
    %c4_24 = arith.constant 4 : index
    %c0_25 = arith.constant 0 : index
    %16 = vector.load %arg9[%c0_23, %c4_24, %c0_25] : memref<12x20x4xf32, #tpu.memory_space<vmem>>, vector<8x16x4xf32>
    %17 = vector.shape_cast %16 : vector<8x16x4xf32> to vector<128x4xf32>
    %18 = arith.truncf %17 : vector<128x4xf32> to vector<128x4xbf16>
    %c0_26 = arith.constant 0 : index
    %c8_27 = arith.constant 8 : index
    %19 = vector.load %arg10[%c0_26, %c8_27] : memref<128x68xbf16, #tpu.memory_space<vmem>>, vector<128x4xbf16>
    tpu.vector_store %arg10[%c0_26, %c8_27], %18 {strides = array<i32>} : memref<128x68xbf16, #tpu.memory_space<vmem>>, vector<128x4xbf16>,
    %c1 = arith.constant 1 : index
    %c1_28 = arith.constant 1 : index
    %c0_29 = arith.constant 0 : index
    %20 = vector.load %arg9[%c1, %c1_28, %c0_29] : memref<12x20x4xf32, #tpu.memory_space<vmem>>, vector<8x16x4xf32>
    %21 = vector.shape_cast %20 : vector<8x16x4xf32> to vector<128x4xf32>
    %22 = arith.truncf %21 : vector<128x4xf32> to vector<128x4xbf16>
    %c0_30 = arith.constant 0 : index
    %c12 = arith.constant 12 : index
    %23 = vector.load %arg10[%c0_30, %c12] : memref<128x68xbf16, #tpu.memory_space<vmem>>, vector<128x4xbf16>
    tpu.vector_store %arg10[%c0_30, %c12], %22 {strides = array<i32>} : memref<128x68xbf16, #tpu.memory_space<vmem>>, vector<128x4xbf16>,
    %c1_31 = arith.constant 1 : index
    %c2_32 = arith.constant 2 : index
    %c0_33 = arith.constant 0 : index
    %24 = vector.load %arg9[%c1_31, %c2_32, %c0_33] : memref<12x20x4xf32, #tpu.memory_space<vmem>>, vector<8x16x4xf32>
    %25 = vector.shape_cast %24 : vector<8x16x4xf32> to vector<128x4xf32>
    %26 = arith.truncf %25 : vector<128x4xf32> to vector<128x4xbf16>
    %c0_34 = arith.constant 0 : index
    %c16 = arith.constant 16 : index
    %27 = vector.load %arg10[%c0_34, %c16] : memref<128x68xbf16, #tpu.memory_space<vmem>>, vector<128x4xbf16>
    tpu.vector_store %arg10[%c0_34, %c16], %26 {strides = array<i32>} : memref<128x68xbf16, #tpu.memory_space<vmem>>, vector<128x4xbf16>,
    %c1_35 = arith.constant 1 : index
    %c3 = arith.constant 3 : index
    %c0_36 = arith.constant 0 : index
    %28 = vector.load %arg9[%c1_35, %c3, %c0_36] : memref<12x20x4xf32, #tpu.memory_space<vmem>>, vector<8x16x4xf32>
    %29 = vector.shape_cast %28 : vector<8x16x4xf32> to vector<128x4xf32>
    %30 = arith.truncf %29 : vector<128x4xf32> to vector<128x4xbf16>
    %c0_37 = arith.constant 0 : index
    %c20 = arith.constant 20 : index
    %31 = vector.load %arg10[%c0_37, %c20] : memref<128x68xbf16, #tpu.memory_space<vmem>>, vector<128x4xbf16>
    tpu.vector_store %arg10[%c0_37, %c20], %30 {strides = array<i32>} : memref<128x68xbf16, #tpu.memory_space<vmem>>, vector<128x4xbf16>,
    %c2_38 = arith.constant 2 : index
    %c0_39 = arith.constant 0 : index
    %c0_40 = arith.constant 0 : index
    %32 = vector.load %arg9[%c2_38, %c0_39, %c0_40] : memref<12x20x4xf32, #tpu.memory_space<vmem>>, vector<8x16x4xf32>
    %33 = vector.shape_cast %32 : vector<8x16x4xf32> to vector<128x4xf32>
    %34 = arith.truncf %33 : vector<128x4xf32> to vector<128x4xbf16>
    %c0_41 = arith.constant 0 : index
    %c24 = arith.constant 24 : index
    %35 = vector.load %arg10[%c0_41, %c24] : memref<128x68xbf16, #tpu.memory_space<vmem>>, vector<128x4xbf16>
    tpu.vector_store %arg10[%c0_41, %c24], %34 {strides = array<i32>} : memref<128x68xbf16, #tpu.memory_space<vmem>>, vector<128x4xbf16>,
    %c2_42 = arith.constant 2 : index
    %c1_43 = arith.constant 1 : index
    %c0_44 = arith.constant 0 : index
    %36 = vector.load %arg9[%c2_42, %c1_43, %c0_44] : memref<12x20x4xf32, #tpu.memory_space<vmem>>, vector<8x16x4xf32>
    %37 = vector.shape_cast %36 : vector<8x16x4xf32> to vector<128x4xf32>
    %38 = arith.truncf %37 : vector<128x4xf32> to vector<128x4xbf16>
    %c0_45 = arith.constant 0 : index
    %c28 = arith.constant 28 : index
    %39 = vector.load %arg10[%c0_45, %c28] : memref<128x68xbf16, #tpu.memory_space<vmem>>, vector<128x4xbf16>
    tpu.vector_store %arg10[%c0_45, %c28], %38 {strides = array<i32>} : memref<128x68xbf16, #tpu.memory_space<vmem>>, vector<128x4xbf16>,
    %c2_46 = arith.constant 2 : index
    %c2_47 = arith.constant 2 : index
    %c0_48 = arith.constant 0 : index
    %40 = vector.load %arg9[%c2_46, %c2_47, %c0_48] : memref<12x20x4xf32, #tpu.memory_space<vmem>>, vector<8x16x4xf32>
    %41 = vector.shape_cast %40 : vector<8x16x4xf32> to vector<128x4xf32>
    %42 = arith.truncf %41 : vector<128x4xf32> to vector<128x4xbf16>
    %c0_49 = arith.constant 0 : index
    %c32 = arith.constant 32 : index
    %43 = vector.load %arg10[%c0_49, %c32] : memref<128x68xbf16, #tpu.memory_space<vmem>>, vector<128x4xbf16>
    tpu.vector_store %arg10[%c0_49, %c32], %42 {strides = array<i32>} : memref<128x68xbf16, #tpu.memory_space<vmem>>, vector<128x4xbf16>,
    %c2_50 = arith.constant 2 : index
    %c3_51 = arith.constant 3 : index
    %c0_52 = arith.constant 0 : index
    %44 = vector.load %arg9[%c2_50, %c3_51, %c0_52] : memref<12x20x4xf32, #tpu.memory_space<vmem>>, vector<8x16x4xf32>
    %45 = vector.shape_cast %44 : vector<8x16x4xf32> to vector<128x4xf32>
    %46 = arith.truncf %45 : vector<128x4xf32> to vector<128x4xbf16>
    %c0_53 = arith.constant 0 : index
    %c36 = arith.constant 36 : index
    %47 = vector.load %arg10[%c0_53, %c36] : memref<128x68xbf16, #tpu.memory_space<vmem>>, vector<128x4xbf16>
    tpu.vector_store %arg10[%c0_53, %c36], %46 {strides = array<i32>} : memref<128x68xbf16, #tpu.memory_space<vmem>>, vector<128x4xbf16>,
    %c2_54 = arith.constant 2 : index
    %c4_55 = arith.constant 4 : index
    %c0_56 = arith.constant 0 : index
    %48 = vector.load %arg9[%c2_54, %c4_55, %c0_56] : memref<12x20x4xf32, #tpu.memory_space<vmem>>, vector<8x16x4xf32>
    %49 = vector.shape_cast %48 : vector<8x16x4xf32> to vector<128x4xf32>
    %50 = arith.truncf %49 : vector<128x4xf32> to vector<128x4xbf16>
    %c0_57 = arith.constant 0 : index
    %c40 = arith.constant 40 : index
    %51 = vector.load %arg10[%c0_57, %c40] : memref<128x68xbf16, #tpu.memory_space<vmem>>, vector<128x4xbf16>
    tpu.vector_store %arg10[%c0_57, %c40], %50 {strides = array<i32>} : memref<128x68xbf16, #tpu.memory_space<vmem>>, vector<128x4xbf16>,
    %c3_58 = arith.constant 3 : index
    %c1_59 = arith.constant 1 : index
    %c0_60 = arith.constant 0 : index
    %52 = vector.load %arg9[%c3_58, %c1_59, %c0_60] : memref<12x20x4xf32, #tpu.memory_space<vmem>>, vector<8x16x4xf32>
    %53 = vector.shape_cast %52 : vector<8x16x4xf32> to vector<128x4xf32>
    %54 = arith.truncf %53 : vector<128x4xf32> to vector<128x4xbf16>
    %c0_61 = arith.constant 0 : index
    %c44 = arith.constant 44 : index
    %55 = vector.load %arg10[%c0_61, %c44] : memref<128x68xbf16, #tpu.memory_space<vmem>>, vector<128x4xbf16>
    tpu.vector_store %arg10[%c0_61, %c44], %54 {strides = array<i32>} : memref<128x68xbf16, #tpu.memory_space<vmem>>, vector<128x4xbf16>,
    %c3_62 = arith.constant 3 : index
    %c2_63 = arith.constant 2 : index
    %c0_64 = arith.constant 0 : index
    %56 = vector.load %arg9[%c3_62, %c2_63, %c0_64] : memref<12x20x4xf32, #tpu.memory_space<vmem>>, vector<8x16x4xf32>
    %57 = vector.shape_cast %56 : vector<8x16x4xf32> to vector<128x4xf32>
    %58 = arith.truncf %57 : vector<128x4xf32> to vector<128x4xbf16>
    %c0_65 = arith.constant 0 : index
    %c48 = arith.constant 48 : index
    %59 = vector.load %arg10[%c0_65, %c48] : memref<128x68xbf16, #tpu.memory_space<vmem>>, vector<128x4xbf16>
    tpu.vector_store %arg10[%c0_65, %c48], %58 {strides = array<i32>} : memref<128x68xbf16, #tpu.memory_space<vmem>>, vector<128x4xbf16>,
    %c3_66 = arith.constant 3 : index
    %c3_67 = arith.constant 3 : index
    %c0_68 = arith.constant 0 : index
    %60 = vector.load %arg9[%c3_66, %c3_67, %c0_68] : memref<12x20x4xf32, #tpu.memory_space<vmem>>, vector<8x16x4xf32>
    %61 = vector.shape_cast %60 : vector<8x16x4xf32> to vector<128x4xf32>
    %62 = arith.truncf %61 : vector<128x4xf32> to vector<128x4xbf16>
    %c0_69 = arith.constant 0 : index
    %c52 = arith.constant 52 : index
    %63 = vector.load %arg10[%c0_69, %c52] : memref<128x68xbf16, #tpu.memory_space<vmem>>, vector<128x4xbf16>
    tpu.vector_store %arg10[%c0_69, %c52], %62 {strides = array<i32>} : memref<128x68xbf16, #tpu.memory_space<vmem>>, vector<128x4xbf16>,
    %c4_70 = arith.constant 4 : index
    %c0_71 = arith.constant 0 : index
    %c0_72 = arith.constant 0 : index
    %64 = vector.load %arg9[%c4_70, %c0_71, %c0_72] : memref<12x20x4xf32, #tpu.memory_space<vmem>>, vector<8x16x4xf32>
    %65 = vector.shape_cast %64 : vector<8x16x4xf32> to vector<128x4xf32>
    %66 = arith.truncf %65 : vector<128x4xf32> to vector<128x4xbf16>
    %c0_73 = arith.constant 0 : index
    %c56 = arith.constant 56 : index
    %67 = vector.load %arg10[%c0_73, %c56] : memref<128x68xbf16, #tpu.memory_space<vmem>>, vector<128x4xbf16>
    tpu.vector_store %arg10[%c0_73, %c56], %66 {strides = array<i32>} : memref<128x68xbf16, #tpu.memory_space<vmem>>, vector<128x4xbf16>,
    %c4_74 = arith.constant 4 : index
    %c2_75 = arith.constant 2 : index
    %c0_76 = arith.constant 0 : index
    %68 = vector.load %arg9[%c4_74, %c2_75, %c0_76] : memref<12x20x4xf32, #tpu.memory_space<vmem>>, vector<8x16x4xf32>
    %69 = vector.shape_cast %68 : vector<8x16x4xf32> to vector<128x4xf32>
    %70 = arith.truncf %69 : vector<128x4xf32> to vector<128x4xbf16>
    %c0_77 = arith.constant 0 : index
    %c60 = arith.constant 60 : index
    %71 = vector.load %arg10[%c0_77, %c60] : memref<128x68xbf16, #tpu.memory_space<vmem>>, vector<128x4xbf16>
    tpu.vector_store %arg10[%c0_77, %c60], %70 {strides = array<i32>} : memref<128x68xbf16, #tpu.memory_space<vmem>>, vector<128x4xbf16>,
    %c4_78 = arith.constant 4 : index
    %c4_79 = arith.constant 4 : index
    %c0_80 = arith.constant 0 : index
    %72 = vector.load %arg9[%c4_78, %c4_79, %c0_80] : memref<12x20x4xf32, #tpu.memory_space<vmem>>, vector<8x16x4xf32>
    %73 = vector.shape_cast %72 : vector<8x16x4xf32> to vector<128x4xf32>
    %74 = arith.truncf %73 : vector<128x4xf32> to vector<128x4xbf16>
    %c0_81 = arith.constant 0 : index
    %c64 = arith.constant 64 : index
    %75 = vector.load %arg10[%c0_81, %c64] : memref<128x68xbf16, #tpu.memory_space<vmem>>, vector<128x4xbf16>
    tpu.vector_store %arg10[%c0_81, %c64], %74 {strides = array<i32>} : memref<128x68xbf16, #tpu.memory_space<vmem>>, vector<128x4xbf16>,
    %c0_82 = arith.constant 0 : index
    %c0_83 = arith.constant 0 : index
    %76 = vector.load %arg10[%c0_82, %c0_83] : memref<128x68xbf16, #tpu.memory_space<vmem>>, vector<128x68xbf16>
    %c0_84 = arith.constant 0 : index
    %c0_85 = arith.constant 0 : index
    %77 = vector.load %arg4[%c0_84, %c0_85] : memref<68x12xbf16, #tpu.memory_space<vmem>>, vector<68x12xbf16>
    %cst = arith.constant dense<0.000000e+00> : vector<128x12xf32>
    %78 = tpu.matmul %76, %77, %cst {dimension_numbers = #tpu.dot_dimension_numbers<[1], [0], [0], [1], [0, 0, 1, 1], [], []>} : vector<128x68xbf16>, vector<68x12xbf16>, vector<128x12xf32> -> vector<128x12xf32>
    %c0_86 = arith.constant 0 : index
    %c0_87 = arith.constant 0 : index
    %79 = vector.load %arg5[%c0_86, %c0_87] : memref<1x12xf32, #tpu.memory_space<vmem>>, vector<1x12xf32>
    %80 = vector.broadcast %79 : vector<1x12xf32> to vector<128x12xf32>
    %81 = arith.addf %78, %80 : vector<128x12xf32>
    %cst_88 = arith.constant 0.000000e+00 : f32
    %82 = vector.broadcast %cst_88 : f32 to vector<128x12xf32>
    %83 = arith.maximumf %81, %82 : vector<128x12xf32>
    %84 = arith.truncf %83 : vector<128x12xf32> to vector<128x12xbf16>
    %c0_89 = arith.constant 0 : index
    %c0_90 = arith.constant 0 : index
    %85 = vector.load %arg6[%c0_89, %c0_90] : memref<12x4xbf16, #tpu.memory_space<vmem>>, vector<12x4xbf16>
    %cst_91 = arith.constant dense<0.000000e+00> : vector<128x4xf32>
    %86 = tpu.matmul %84, %85, %cst_91 {dimension_numbers = #tpu.dot_dimension_numbers<[1], [0], [0], [1], [0, 0, 1, 1], [], []>} : vector<128x12xbf16>, vector<12x4xbf16>, vector<128x4xf32> -> vector<128x4xf32>
    %c0_92 = arith.constant 0 : index
    %c0_93 = arith.constant 0 : index
    %87 = vector.load %arg7[%c0_92, %c0_93] : memref<1x4xf32, #tpu.memory_space<vmem>>, vector<1x4xf32>
    %88 = vector.broadcast %87 : vector<1x4xf32> to vector<128x4xf32>
    %89 = arith.addf %86, %88 : vector<128x4xf32>
    %cst_94 = arith.constant 0.000000e+00 : f32
    %90 = vector.broadcast %cst_94 : f32 to vector<128x4xf32>
    %91 = arith.subf %90, %89 : vector<128x4xf32>
    %92 = math.exp %91 : vector<128x4xf32>
    %cst_95 = arith.constant 1.000000e+00 : f32
    %93 = vector.broadcast %cst_95 : f32 to vector<128x4xf32>
    %94 = arith.addf %93, %92 : vector<128x4xf32>
    %95 = tpu.reciprocal %94 {approx = true} : vector<128x4xf32> -> vector<128x4xf32>
    %cst_96 = arith.constant 1.000000e+00 : f32
    %96 = vector.broadcast %cst_96 : f32 to vector<128x4xf32>
    %97 = arith.addf %96, %95 : vector<128x4xf32>
    %98 = arith.mulf %7, %97 : vector<128x4xf32>
    %c0_97 = arith.constant 0 : index
    %c0_98 = arith.constant 0 : index
    %c0_99 = arith.constant 0 : index
    %99 = vector.load %arg8[%c0_97, %c0_98, %c0_99] : memref<1x128x4xf32, #tpu.memory_space<vmem>>, vector<1x128x4xf32>
    %100 = vector.shape_cast %99 : vector<1x128x4xf32> to vector<128x4xf32>
    %101 = vector.shape_cast %98 : vector<128x4xf32> to vector<1x128x4xf32>
    tpu.vector_store %arg8[%c0_97, %c0_98, %c0_99], %101 {strides = array<i32>} : memref<1x128x4xf32, #tpu.memory_space<vmem>>, vector<1x128x4xf32>,
    return
  }
  func.func @transform_0(%arg0: i32, %arg1: i32) -> (i32, i32, i32, i32) {
    %c0_i32 = arith.constant 0 : i32
    %c0_i32_0 = arith.constant 0 : i32
    %c0_i32_1 = arith.constant 0 : i32
    return %arg0, %arg1, %c0_i32, %c0_i32_0 : i32, i32, i32, i32
  }
  func.func @transform_1(%arg0: i32, %arg1: i32) -> (i32, i32, i32, i32) {
    %c1_i32 = arith.constant 1 : i32
    %0 = arith.addi %arg1, %c1_i32 : i32
    %c2_i32 = arith.constant 2 : i32
    %1 = arith.muli %0, %c2_i32 : i32
    %c0_i32 = arith.constant 0 : i32
    %c0_i32_0 = arith.constant 0 : i32
    %c0_i32_1 = arith.constant 0 : i32
    return %arg0, %1, %c0_i32, %c0_i32_0 : i32, i32, i32, i32
  }
  func.func @transform_2(%arg0: i32, %arg1: i32) -> (i32, i32) {
    %c0_i32 = arith.constant 0 : i32
    %c0_i32_0 = arith.constant 0 : i32
    %c0_i32_1 = arith.constant 0 : i32
    return %c0_i32, %c0_i32_0 : i32, i32
  }
  func.func @transform_3(%arg0: i32, %arg1: i32) -> (i32, i32) {
    %c0_i32 = arith.constant 0 : i32
    %c0_i32_0 = arith.constant 0 : i32
    %c0_i32_1 = arith.constant 0 : i32
    return %c0_i32, %c0_i32_0 : i32, i32
  }
  func.func @transform_4(%arg0: i32, %arg1: i32) -> (i32, i32) {
    %c0_i32 = arith.constant 0 : i32
    %c0_i32_0 = arith.constant 0 : i32
    %c0_i32_1 = arith.constant 0 : i32
    return %c0_i32, %c0_i32_0 : i32, i32
  }
  func.func @transform_5(%arg0: i32, %arg1: i32) -> (i32, i32) {
    %c0_i32 = arith.constant 0 : i32
    %c0_i32_0 = arith.constant 0 : i32
    %c0_i32_1 = arith.constant 0 : i32
    return %c0_i32, %c0_i32_0 : i32, i32
  }
  func.func @transform_6(%arg0: i32, %arg1: i32) -> (i32, i32, i32) {
    %c0_i32 = arith.constant 0 : i32
    %c0_i32_0 = arith.constant 0 : i32
    return %arg0, %arg1, %c0_i32 : i32, i32, i32
  }
}

</mosaic_0001>

<llo_original>
// kernel: msag_forward.1
$region0: #{msag_forward.1}
  #allocation0 [shape = 'u32[]', space=smem, size = 0x4, offset = 0x4, fixed_abs, tag = 'smem constant byte address 0x4 - core index']
  #allocation1 [shape = 'u32[144,128]{1,0:T(1,128)}', space=vmem, size = 0x12000, scoped, tag = 'internal scratch']
  #allocation2 [shape = 'f32[12,20,4]{2,1,0:T(8,128)}', space=vmem, size = 0x24000, scoped, tag = 'scratch operand']
  #allocation3 [shape = 'bf16[128,68]{1,0:T(16,128)(2,1)}', space=vmem, size = 0x8000, scoped, tag = 'scratch operand']
  %s0 = inlined_call_operand.vmem [shape: f32[2,20,20,4], index: 0, kind: input, shape index: {}, may-alias: {0,1}]
  %s1 = inlined_call_operand.vmem [shape: f32[2,20,20,4], index: 1, kind: input, shape index: {}, may-alias: {0,1}]
  %s2 = inlined_call_operand.vmem [shape: bf16[68,12], index: 2, kind: input, shape index: {}]
  %s3 = inlined_call_operand.vmem [shape: f32[1,12], index: 3, kind: input, shape index: {}]
  %s4 = inlined_call_operand.vmem [shape: bf16[12,4], index: 4, kind: input, shape index: {}]
  %s5 = inlined_call_operand.vmem [shape: f32[1,4], index: 5, kind: input, shape index: {}]
  %s6 = inlined_call_operand.vmem [shape: f32[2,256,4], index: 6, kind: output, shape index: {}]
  %s7 = sld [smem:[#allocation0]]
  $region57: #{msag_forward.1} parent=0
    _
  %s9 = ssub.s32 1, %s7
  %s10 = scalar_select 0, %s9, %s7
  loop: start=0, step=1, limit=6
  $region2: #{msag_forward.1} parent=0 // loop_pre_header
    _
  $region3: #{msag_forward.1} parent=0 // loop_header
    %s12 = sphi 0, %s16
    %p13 = scmp.ge.s32.totalorder %s12, 6
    %s19 = sphi 0, %s31
    %s20 = sphi 0, %s27
    %s21 = sphi 0, %s19
    %s22 = sphi 0, %s20
    %s23 = sphi 0, %s21
    %s24 = sphi 0, %s22
    %s36 = sphi 0, %s38
    %s39 = sphi 0, %s36
    %s40 = sphi 0, %s39
    %s56 = sphi 0, %s40
    %s68 = sphi 0, %s70
    %s71 = sphi 0, %s68
    %s72 = sphi 0, %s71
    %s88 = sphi 0, %s72
    %s92 = sphi 0, %s92
    %s94 = sphi 0, %s92
    %s95 = sphi 0, %s94
    %s109 = sphi 0, %s95
    %s113 = sphi 0, %s113
    %s115 = sphi 0, %s113
    %s116 = sphi 0, %s115
    %s130 = sphi 0, %s116
    %s134 = sphi 0, %s134
    %s136 = sphi 0, %s134
    %s137 = sphi 0, %s136
    %s151 = sphi 0, %s137
    %s155 = sphi 0, %s155
    %s157 = sphi 0, %s155
    %s158 = sphi 0, %s157
    %s172 = sphi 0, %s158
    %s180 = sphi 0, %s182
    %s183 = sphi 0, %s180
    %s184 = sphi 0, %s183
    %s200 = sphi 0, %s184
  $region4: #{msag_forward.1} parent=0 // loop_header_branch
    %15 = sbr.rel (%p13) target = $region8
  $region5: #{msag_forward.1} parent=0 // loop_body
    %s17 = ssub.s32 %s12, 1
    %s18 = ssub.s32 %s12, 2
    %s25 = sadd.s32 1, %s20
    %p26 = scmp.ge.s32.totalorder %s25, 2
    %s27 = scalar_select %p26, 0, %s25
    %s28 = sadd.s32 1, %s19
    %s29 = scalar_select %p26, %s28, %s19
    %p30 = scmp.ge.s32.totalorder %s29, 2
    %s31 = scalar_select %p30, 0, %s29
    %s32 = ssub.s32 %s19, %s31
    %s33 = ssub.s32 %s20, %s27
    %s34 = sor.u32 %s32, %s33
    %p35 = scmp.eq.s32.totalorder %s34, 0
    %s37 = sadd.s32 %s36, 1
    %s38 = scalar_select %p35, %s36, %s37
    %p41 = pneg %p35
    %p42 = scmp.eq.s32.totalorder %s12, 3
    %p43 = por %p41, %p42
    %p44 = scmp.ne.s32.totalorder %s36, %s39
    %p45 = scmp.eq.s32.totalorder %s12, 0
    %p46 = por %p44, %p45
    %p47 = scmp.ne.s32.totalorder %s36, %s39
    %p48 = scmp.eq.s32.totalorder %s17, 3
    %p49 = por %p47, %p48
    %p50 = scmp.ne.s32.totalorder %s39, %s40
    %p51 = scmp.eq.s32.totalorder %s17, 0
    %p52 = por %p50, %p51
    %p53 = scmp.ne.s32.totalorder %s39, %s40
    %p54 = scmp.eq.s32.totalorder %s18, 3
    %p55 = por %p53, %p54
    %p57 = scmp.ne.s32.totalorder %s40, %s56
    %p58 = scmp.eq.s32.totalorder %s18, 0
    %p59 = por %p57, %p58
    %s60 = sadd.s32 %s20, 1
    %s61 = smul.u32 %s60, 2
    %s62 = sadd.s32 %s27, 1
    %s63 = smul.u32 %s62, 2
    %s64 = ssub.s32 %s19, %s31
    %s65 = ssub.s32 %s61, %s63
    %s66 = sor.u32 %s64, %s65
    %p67 = scmp.eq.s32.totalorder %s66, 0
    %s69 = sadd.s32 %s68, 1
    %s70 = scalar_select %p67, %s68, %s69
    %p73 = pneg %p67
    %p74 = scmp.eq.s32.totalorder %s12, 3
    %p75 = por %p73, %p74
    %p76 = scmp.ne.s32.totalorder %s68, %s71
    %p77 = scmp.eq.s32.totalorder %s12, 0
    %p78 = por %p76, %p77
    %p79 = scmp.ne.s32.totalorder %s68, %s71
    %p80 = scmp.eq.s32.totalorder %s17, 3
    %p81 = por %p79, %p80
    %p82 = scmp.ne.s32.totalorder %s71, %s72
    %p83 = scmp.eq.s32.totalorder %s17, 0
    %p84 = por %p82, %p83
    %p85 = scmp.ne.s32.totalorder %s71, %s72
    %p86 = scmp.eq.s32.totalorder %s18, 3
    %p87 = por %p85, %p86
    %p89 = scmp.ne.s32.totalorder %s72, %s88
    %p90 = scmp.eq.s32.totalorder %s18, 0
    %p91 = por %p89, %p90
    %s93 = sadd.s32 %s92, 1
    %p96 = scmp.eq.s32.totalorder %s12, 3
    %p97 = scmp.ne.s32.totalorder %s92, %s94
    %p98 = scmp.eq.s32.totalorder %s12, 0
    %p99 = por %p97, %p98
    %p100 = scmp.ne.s32.totalorder %s92, %s94
    %p101 = scmp.eq.s32.totalorder %s17, 3
    %p102 = por %p100, %p101
    %p103 = scmp.ne.s32.totalorder %s94, %s95
    %p104 = scmp.eq.s32.totalorder %s17, 0
    %p105 = por %p103, %p104
    %p106 = scmp.ne.s32.totalorder %s94, %s95
    %p107 = scmp.eq.s32.totalorder %s18, 3
    %p108 = por %p106, %p107
    %p110 = scmp.ne.s32.totalorder %s95, %s109
    %p111 = scmp.eq.s32.totalorder %s18, 0
    %p112 = por %p110, %p111
    %s114 = sadd.s32 %s113, 1
    %p117 = scmp.eq.s32.totalorder %s12, 3
    %p118 = scmp.ne.s32.totalorder %s113, %s115
    %p119 = scmp.eq.s32.totalorder %s12, 0
    %p120 = por %p118, %p119
    %p121 = scmp.ne.s32.totalorder %s113, %s115
    %p122 = scmp.eq.s32.totalorder %s17, 3
    %p123 = por %p121, %p122
    %p124 = scmp.ne.s32.totalorder %s115, %s116
    %p125 = scmp.eq.s32.totalorder %s17, 0
    %p126 = por %p124, %p125
    %p127 = scmp.ne.s32.totalorder %s115, %s116
    %p128 = scmp.eq.s32.totalorder %s18, 3
    %p129 = por %p127, %p128
    %p131 = scmp.ne.s32.totalorder %s116, %s130
    %p132 = scmp.eq.s32.totalorder %s18, 0
    %p133 = por %p131, %p132
    %s135 = sadd.s32 %s134, 1
    %p138 = scmp.eq.s32.totalorder %s12, 3
    %p139 = scmp.ne.s32.totalorder %s134, %s136
    %p140 = scmp.eq.s32.totalorder %s12, 0
    %p141 = por %p139, %p140
    %p142 = scmp.ne.s32.totalorder %s134, %s136
    %p143 = scmp.eq.s32.totalorder %s17, 3
    %p144 = por %p142, %p143
    %p145 = scmp.ne.s32.totalorder %s136, %s137
    %p146 = scmp.eq.s32.totalorder %s17, 0
    %p147 = por %p145, %p146
    %p148 = scmp.ne.s32.totalorder %s136, %s137
    %p149 = scmp.eq.s32.totalorder %s18, 3
    %p150 = por %p148, %p149
    %p152 = scmp.ne.s32.totalorder %s137, %s151
    %p153 = scmp.eq.s32.totalorder %s18, 0
    %p154 = por %p152, %p153
    %s156 = sadd.s32 %s155, 1
    %p159 = scmp.eq.s32.totalorder %s12, 3
    %p160 = scmp.ne.s32.totalorder %s155, %s157
    %p161 = scmp.eq.s32.totalorder %s12, 0
    %p162 = por %p160, %p161
    %p163 = scmp.ne.s32.totalorder %s155, %s157
    %p164 = scmp.eq.s32.totalorder %s17, 3
    %p165 = por %p163, %p164
    %p166 = scmp.ne.s32.totalorder %s157, %s158
    %p167 = scmp.eq.s32.totalorder %s17, 0
    %p168 = por %p166, %p167
    %p169 = scmp.ne.s32.totalorder %s157, %s158
    %p170 = scmp.eq.s32.totalorder %s18, 3
    %p171 = por %p169, %p170
    %p173 = scmp.ne.s32.totalorder %s158, %s172
    %p174 = scmp.eq.s32.totalorder %s18, 0
    %p175 = por %p173, %p174
    %s176 = ssub.s32 %s19, %s31
    %s177 = ssub.s32 %s20, %s27
    %s178 = sor.u32 %s176, %s177
    %p179 = scmp.eq.s32.totalorder %s178, 0
    %s181 = sadd.s32 %s180, 1
    %s182 = scalar_select %p179, %s180, %s181
    %p185 = pneg %p179
    %p186 = scmp.eq.s32.totalorder %s12, 3
    %p187 = por %p185, %p186
    %p188 = scmp.ne.s32.totalorder %s180, %s183
    %p189 = scmp.eq.s32.totalorder %s12, 0
    %p190 = por %p188, %p189
    %p191 = scmp.ne.s32.totalorder %s180, %s183
    %p192 = scmp.eq.s32.totalorder %s17, 3
    %p193 = por %p191, %p192
    %p194 = scmp.ne.s32.totalorder %s183, %s184
    %p195 = scmp.eq.s32.totalorder %s17, 0
    %p196 = por %p194, %p195
    %p197 = scmp.ne.s32.totalorder %s183, %s184
    %p198 = scmp.eq.s32.totalorder %s18, 3
    %p199 = por %p197, %p198
    %p201 = scmp.ne.s32.totalorder %s184, %s200
    %p202 = scmp.eq.s32.totalorder %s18, 0
    %p203 = por %p201, %p202
    %p204 = scmp.le.s32.totalorder 1, %s12
    %p205 = scmp.lt.s32.totalorder %s12, 5
    %p206 = pnand %p204, %p205
    %p207 = pneg %p206
    // Predicated region
    $region9: #{msag_forward.1} parent=5 // pred_check
      _
    $region10: #{msag_forward.1} parent=5 // pred_check_branch
      %209 = sbr.rel (%p206) target = $region12
    $region11: #{msag_forward.1} parent=5 // pred_region
      %s210 = ssub.s32 %s12, 1
      // Predicated region
      $region13: #{msag_forward.1} parent=11 // pred_check
        %p211 = pneg %p105
      $region14: #{msag_forward.1} parent=11 // pred_check_branch
        %213 = sbr.rel (%p211) target = $region16
      $region15: #{msag_forward.1} parent=11 // pred_region
        _
      $region16: #{msag_forward.1} parent=11 // pred_fallthru
        _
      // Predicated region
      $region17: #{msag_forward.1} parent=11 // pred_check
        %p214 = pneg %p126
      $region18: #{msag_forward.1} parent=11 // pred_check_branch
        %216 = sbr.rel (%p214) target = $region20
      $region19: #{msag_forward.1} parent=11 // pred_region
        _
      $region20: #{msag_forward.1} parent=11 // pred_fallthru
        _
      // Predicated region
      $region21: #{msag_forward.1} parent=11 // pred_check
        %p217 = pneg %p147
      $region22: #{msag_forward.1} parent=11 // pred_check_branch
        %219 = sbr.rel (%p217) target = $region24
      $region23: #{msag_forward.1} parent=11 // pred_region
        _
      $region24: #{msag_forward.1} parent=11 // pred_fallthru
        _
      // Predicated region
      $region25: #{msag_forward.1} parent=11 // pred_check
        %p220 = pneg %p168
      $region26: #{msag_forward.1} parent=11 // pred_check_branch
        %222 = sbr.rel (%p220) target = $region28
      $region27: #{msag_forward.1} parent=11 // pred_region
        _
      $region28: #{msag_forward.1} parent=11 // pred_fallthru
        _
    $region12: #{msag_forward.1} parent=5 // pred_fallthru
      _
    %p223 = scmp.lt.s32.totalorder %s12, 4
    // Predicated region
    $region29: #{msag_forward.1} parent=5 // pred_check
      %p224 = pneg %p223
    $region30: #{msag_forward.1} parent=5 // pred_check_branch
      %226 = sbr.rel (%p224) target = $region32
    $region31: #{msag_forward.1} parent=5 // pred_region
      // Predicated region
      $region33: #{msag_forward.1} parent=31 // pred_check
        %p227 = pneg %p46
      $region34: #{msag_forward.1} parent=31 // pred_check_branch
        %229 = sbr.rel (%p227) target = $region36
      $region35: #{msag_forward.1} parent=31 // pred_region
        %s230 = smul.u32 8, %s20
        %s231 = ssub.s32 20, %s230
        %p232 = scmp.lt.s32.totalorder %s231, 8
        %s233 = scalar_select %p232, %s231, 8
        %s234 = smul.u32 128, %s233
        %s235 = smul.u32 %s234, 3
        %p236 = scmp.lt.s32.totalorder %s19, 1
        %s237 = scalar_select %p236, %s19, 1
        %p238 = scmp.lt.s32.totalorder %s230, 19
        %s239 = scalar_select %p238, %s230, 19
        %s240 = smul.addr %s239, 3
        %s241 = smul.addr %s237, 60
        %s242 = sadd.s32 %s240, %s241
        %s243 = smul.addr %s242, 8
        %s244 = scalar_lea.vmem %s0, %s243
        %s245 = smul.u32 8, %s20
        %s246 = ssub.s32 20, %s245
        %p247 = scmp.lt.s32.totalorder %s246, 8
        %s248 = scalar_select %p247, %s246, 8
        %s249 = smul.u32 128, %s248
        %s250 = smul.u32 %s249, 3
      $region36: #{msag_forward.1} parent=31 // pred_fallthru
        _
      // Predicated region
      $region37: #{msag_forward.1} parent=31 // pred_check
        %p251 = pneg %p78
      $region38: #{msag_forward.1} parent=31 // pred_check_branch
        %253 = sbr.rel (%p251) target = $region40
      $region39: #{msag_forward.1} parent=31 // pred_region
        %s254 = sadd.s32 %s20, 1
        %s255 = smul.u32 %s254, 2
        %s256 = smul.u32 4, %s255
        %p257 = scmp.lt.s32.totalorder %s19, 1
        %s258 = scalar_select %p257, %s19, 1
        %p259 = scmp.lt.s32.totalorder %s256, 19
        %s260 = scalar_select %p259, %s256, 19
        %s261 = smul.addr %s260, 3
        %s262 = smul.addr %s258, 60
        %s263 = sadd.s32 %s261, %s262
        %s264 = smul.addr %s263, 8
        %s265 = scalar_lea.vmem %s1, %s264
        %s266 = sadd.s32 %s20, 1
        %s267 = smul.u32 %s266, 2
        %s268 = smul.u32 4, %s267
      $region40: #{msag_forward.1} parent=31 // pred_fallthru
        _
    $region32: #{msag_forward.1} parent=5 // pred_fallthru
      _
    %p269 = scmp.le.s32.totalorder 1, %s12
    %p270 = scmp.lt.s32.totalorder %s12, 5
    %p271 = pnand %p269, %p270
    %p272 = pneg %p271
    // Predicated region
    $region41: #{msag_forward.1} parent=5 // pred_check
      _
    $region42: #{msag_forward.1} parent=5 // pred_check_branch
      %274 = sbr.rel (%p271) target = $region44
    $region43: #{msag_forward.1} parent=5 // pred_region
      %s275 = ssub.s32 %s12, 1
      %s276 = smul.u32 8, %s22
      %s277 = ssub.s32 20, %s276
      %p278 = scmp.lt.s32.totalorder %s277, 8
      %s279 = scalar_select %p278, %s277, 8
      %s280 = smul.u32 128, %s279
      %s281 = smul.u32 %s280, 3
      %p282 = scmp.lt.s32.totalorder %s21, 1
      %s283 = scalar_select %p282, %s21, 1
      %p284 = scmp.lt.s32.totalorder %s276, 19
      %s285 = scalar_select %p284, %s276, 19
      %s286 = smul.addr %s285, 3
      %s287 = smul.addr %s283, 60
      %s288 = sadd.s32 %s286, %s287
      %s289 = smul.addr %s288, 8
      %s290 = scalar_lea.vmem %s0, %s289
      %p291 = pneg %p52
      %p292 = pneg %p49
      %s293 = sadd.s32 %s22, 1
      %s294 = smul.u32 %s293, 2
      %s295 = smul.u32 4, %s294
      %p296 = scmp.lt.s32.totalorder %s21, 1
      %s297 = scalar_select %p296, %s21, 1
      %p298 = scmp.lt.s32.totalorder %s295, 19
      %s299 = scalar_select %p298, %s295, 19
      %s300 = smul.addr %s299, 3
      %s301 = smul.addr %s297, 60
      %s302 = sadd.s32 %s300, %s301
      %s303 = smul.addr %s302, 8
      %s304 = scalar_lea.vmem %s1, %s303
      %p305 = pneg %p84
      %p306 = pneg %p81
      %p307 = pneg %p105
      %p308 = pneg %p102
      %p309 = pneg %p126
      %p310 = pneg %p123
      %p311 = pneg %p147
      %p312 = pneg %p144
      %p313 = pneg %p168
      %p314 = pneg %p165
      %p315 = pneg %p196
      %p316 = pneg %p193
      %s317 = smul.u32 16, %s22
      %p318 = scmp.lt.s32.totalorder %s21, 1
      %s319 = scalar_select %p318, %s21, 1
      %p320 = scmp.lt.s32.totalorder %s317, 31
      %s321 = scalar_select %p320, %s317, 31
      %s322 = smul.addr %s319, 32
      %s323 = sadd.s32 %s321, %s322
      %s324 = smul.addr %s323, 8
      %s325 = scalar_lea.vmem %s6, %s324
      %s326 = smul.u32 8, %s22
      %s327 = ssub.s32 20, %s326
      %p328 = scmp.lt.s32.totalorder %s327, 8
      %s329 = scalar_select %p328, %s327, 8
      %s330 = smul.u32 128, %s329
      %s331 = smul.u32 %s330, 3
      %p332 = scmp.lt.s32.totalorder %s21, 1
      %s333 = scalar_select %p332, %s21, 1
      %p334 = scmp.lt.s32.totalorder %s326, 19
      %s335 = scalar_select %p334, %s326, 19
      %s336 = smul.addr %s335, 3
      %s337 = smul.addr %s333, 60
      %s338 = sadd.s32 %s336, %s337
      %s339 = smul.addr %s338, 8
      %s340 = scalar_lea.vmem %s0, %s339
      %s341 = smul.u32 8, %s22
      %s342 = ssub.s32 20, %s341
      %p343 = scmp.lt.s32.totalorder %s342, 8
      %s344 = scalar_select %p343, %s342, 8
      %s345 = smul.u32 128, %s344
      %s346 = smul.u32 %s345, 3
      %s347 = sadd.s32 %s22, 1
      %s348 = smul.u32 %s347, 2
      %s349 = smul.u32 4, %s348
      %p350 = scmp.lt.s32.totalorder %s21, 1
      %s351 = scalar_select %p350, %s21, 1
      %p352 = scmp.lt.s32.totalorder %s349, 19
      %s353 = scalar_select %p352, %s349, 19
      %s354 = smul.addr %s353, 3
      %s355 = smul.addr %s351, 60
      %s356 = sadd.s32 %s354, %s355
      %s357 = smul.addr %s356, 8
      %s358 = scalar_lea.vmem %s1, %s357
      %s359 = sadd.s32 %s22, 1
      %s360 = smul.u32 %s359, 2
      %s361 = smul.u32 4, %s360
      %s362 = smul.u32 16, %s22
      %p363 = scmp.lt.s32.totalorder %s21, 1
      %s364 = scalar_select %p363, %s21, 1
      %p365 = scmp.lt.s32.totalorder %s362, 31
      %s366 = scalar_select %p365, %s362, 31
      %s367 = smul.addr %s364, 32
      %s368 = sadd.s32 %s366, %s367
      %s369 = smul.addr %s368, 8
      %s370 = scalar_lea.vmem %s6, %s369
      %s371 = smul.u32 16, %s22
      %v373 = vld [vmem:[%s340] sm:$0xff]
      %v374 = vld [vmem:[%s340 + $0x8] sm:$0xff]
      %v375 = vld [vmem:[%s340 + $0x10] sm:$0xf]
      %v376 = vld [vmem:[%s340 + $0x18] sm:$0xff]
      %v377 = vld [vmem:[%s340 + $0x20] sm:$0xff]
      %v378 = vld [vmem:[%s340 + $0x28] sm:$0xf]
      %v379 = vld [vmem:[%s340 + $0x30] sm:$0xff]
      %v380 = vld [vmem:[%s340 + $0x38] sm:$0xff]
      %v381 = vld [vmem:[%s340 + $0x40] sm:$0xf]
      %v382 = vld [vmem:[%s340 + $0x48] sm:$0xff]
      %v383 = vld [vmem:[%s340 + $0x50] sm:$0xff]
      %v384 = vld [vmem:[%s340 + $0x58] sm:$0xf]
      %v385 = vld [vmem:[%s340 + $0x60] sm:$0xff]
      %v386 = vld [vmem:[%s340 + $0x68] sm:$0xff]
      %v387 = vld [vmem:[%s340 + $0x70] sm:$0xf]
      %v388 = vld [vmem:[%s340 + $0x78] sm:$0xff]
      %v389 = vld [vmem:[%s340 + $0x80] sm:$0xff]
      %v390 = vld [vmem:[%s340 + $0x88] sm:$0xf]
      %v391 = vld [vmem:[%s340 + $0x90] sm:$0xff]
      %v392 = vld [vmem:[%s340 + $0x98] sm:$0xff]
      %v393 = vld [vmem:[%s340 + $0xa0] sm:$0xf]
      %v394 = vld [vmem:[%s340 + $0xa8] sm:$0xff]
      %v395 = vld [vmem:[%s340 + $0xb0] sm:$0xff]
      %v396 = vld [vmem:[%s340 + $0xb8] sm:$0xf]
      %vm397 = vcmask 31744
      %398 = vst.msk [vmem:[#allocation2] sm:$0xff] %vm397, %v373
      %399 = vst.msk [vmem:[#allocation2 + $0x8] sm:$0xff] %vm397, %v374
      %vm400 = vcmask 27648
      %401 = vst.msk [vmem:[#allocation2 + $0x10] sm:$0xf] %vm400, %v375
      %402 = vst.msk [vmem:[#allocation2 + $0x18] sm:$0xff] %vm397, %v376
      %403 = vst.msk [vmem:[#allocation2 + $0x20] sm:$0xff] %vm397, %v377
      %404 = vst.msk [vmem:[#allocation2 + $0x28] sm:$0xf] %vm400, %v378
      %405 = vst.msk [vmem:[#allocation2 + $0x30] sm:$0xff] %vm397, %v379
      %406 = vst.msk [vmem:[#allocation2 + $0x38] sm:$0xff] %vm397, %v380
      %407 = vst.msk [vmem:[#allocation2 + $0x40] sm:$0xf] %vm400, %v381
      %408 = vst.msk [vmem:[#allocation2 + $0x48] sm:$0xff] %vm397, %v382
      %409 = vst.msk [vmem:[#allocation2 + $0x50] sm:$0xff] %vm397, %v383
      %410 = vst.msk [vmem:[#allocation2 + $0x58] sm:$0xf] %vm400, %v384
      %411 = vst.msk [vmem:[#allocation2 + $0x60] sm:$0xff] %vm397, %v385
      %412 = vst.msk [vmem:[#allocation2 + $0x68] sm:$0xff] %vm397, %v386
      %413 = vst.msk [vmem:[#allocation2 + $0x70] sm:$0xf] %vm400, %v387
      %414 = vst.msk [vmem:[#allocation2 + $0x78] sm:$0xff] %vm397, %v388
      %415 = vst.msk [vmem:[#allocation2 + $0x80] sm:$0xff] %vm397, %v389
      %416 = vst.msk [vmem:[#allocation2 + $0x88] sm:$0xf] %vm400, %v390
      %417 = vst.msk [vmem:[#allocation2 + $0x90] sm:$0xff] %vm397, %v391
      %418 = vst.msk [vmem:[#allocation2 + $0x98] sm:$0xff] %vm397, %v392
      %419 = vst.msk [vmem:[#allocation2 + $0xa0] sm:$0xf] %vm400, %v393
      %420 = vst.msk [vmem:[#allocation2 + $0xa8] sm:$0xff] %vm397, %v394
      %421 = vst.msk [vmem:[#allocation2 + $0xb0] sm:$0xff] %vm397, %v395
      %422 = vst.msk [vmem:[#allocation2 + $0xb8] sm:$0xf] %vm400, %v396
      %v423 = vld [vmem:[%s358] sm:$0xff]
      %v424 = vld [vmem:[%s358 + $0x8] sm:$0xff]
      %v425 = vld [vmem:[%s358 + $0x10] sm:$0xf]
      %v426 = vld [vmem:[%s358 + $0x18] sm:$0xff]
      %v427 = vld [vmem:[%s358 + $0x20] sm:$0xff]
      %v428 = vld [vmem:[%s358 + $0x28] sm:$0xf]
      %v429 = vld [vmem:[%s358 + $0x30] sm:$0xff]
      %v430 = vld [vmem:[%s358 + $0x38] sm:$0xff]
      %v431 = vld [vmem:[%s358 + $0x40] sm:$0xf]
      %v432 = vld [vmem:[%s358 + $0x48] sm:$0xff]
      %v433 = vld [vmem:[%s358 + $0x50] sm:$0xff]
      %v434 = vld [vmem:[%s358 + $0x58] sm:$0xf]
      %s435 = scalar_lea.vmem [#allocation2], 192
      %436 = vst.msk [vmem:[%s435] sm:$0xff] %vm397, %v423
      %437 = vst.msk [vmem:[%s435 + $0x8] sm:$0xff] %vm397, %v424
      %438 = vst.msk [vmem:[%s435 + $0x10] sm:$0xf] %vm400, %v425
      %439 = vst.msk [vmem:[%s435 + $0x18] sm:$0xff] %vm397, %v426
      %440 = vst.msk [vmem:[%s435 + $0x20] sm:$0xff] %vm397, %v427
      %441 = vst.msk [vmem:[%s435 + $0x28] sm:$0xf] %vm400, %v428
      %442 = vst.msk [vmem:[%s435 + $0x30] sm:$0xff] %vm397, %v429
      %443 = vst.msk [vmem:[%s435 + $0x38] sm:$0xff] %vm397, %v430
      %444 = vst.msk [vmem:[%s435 + $0x40] sm:$0xf] %vm400, %v431
      %445 = vst.msk [vmem:[%s435 + $0x48] sm:$0xff] %vm397, %v432
      %446 = vst.msk [vmem:[%s435 + $0x50] sm:$0xff] %vm397, %v433
      %447 = vst.msk [vmem:[%s435 + $0x58] sm:$0xf] %vm400, %v434
      %s448 = scalar_lea.vmem [#allocation2], 48
      %v449 = vld [vmem:[%s448 + $0x2] sm:$0xff]
      %v450 = vld [vmem:[%s448 + $0xa] sm:$0xff]
      %v451 = vld [vmem:[%s448 + $0x1a] sm:$0xff]
      %v452 = vld [vmem:[%s448 + $0x22] sm:$0xff]
      %v453 = vld [vmem:[%s448 + $0x32] sm:$0xff]
      %v454 = vld [vmem:[%s448 + $0x3a] sm:$0xff]
      %v455 = vld [vmem:[%s448 + $0x4a] sm:$0xff]
      %v456 = vld [vmem:[%s448 + $0x52] sm:$0xff]
      %v457 = vld [vmem:[%s448 + $0x62] sm:$0xff]
      %v458 = vld [vmem:[%s448 + $0x6a] sm:$0xff]
      %v459 = vld [vmem:[%s448 + $0x7a] sm:$0xff]
      %v460 = vld [vmem:[%s448 + $0x82] sm:$0xff]
      %v461 = vld [vmem:[%s448 + $0x92] sm:$0xff]
      %v462 = vld [vmem:[%s448 + $0x9a] sm:$0xff]
      %v463 = vld [vmem:[%s448 + $0xaa] sm:$0xff]
      %v464 = vld [vmem:[%s448 + $0xb2] sm:$0xff]
      %v465 = vld [vmem:[#allocation2] sm:$0xff]
      %v466 = vld [vmem:[#allocation2 + $0x8] sm:$0xff]
      %v467 = vld [vmem:[#allocation2 + $0x18] sm:$0xff]
      %v468 = vld [vmem:[#allocation2 + $0x20] sm:$0xff]
      %v469 = vld [vmem:[#allocation2 + $0x30] sm:$0xff]
      %v470 = vld [vmem:[#allocation2 + $0x38] sm:$0xff]
      %v471 = vld [vmem:[#allocation2 + $0x48] sm:$0xff]
      %v472 = vld [vmem:[#allocation2 + $0x50] sm:$0xff]
      %v473 = vld [vmem:[#allocation2 + $0x60] sm:$0xff]
      %v474 = vld [vmem:[#allocation2 + $0x68] sm:$0xff]
      %v475 = vld [vmem:[#allocation2 + $0x78] sm:$0xff]
      %v476 = vld [vmem:[#allocation2 + $0x80] sm:$0xff]
      %v477 = vld [vmem:[#allocation2 + $0x90] sm:$0xff]
      %v478 = vld [vmem:[#allocation2 + $0x98] sm:$0xff]
      %v479 = vld [vmem:[#allocation2 + $0xa8] sm:$0xff]
      %v480 = vld [vmem:[#allocation2 + $0xb0] sm:$0xff]
      %v481 = vpack.c.bf16 %v466, %v465
      %v482 = vpack.c.bf16 %v468, %v467
      %v483 = vpack.c.bf16 %v470, %v469
      %v484 = vpack.c.bf16 %v472, %v471
      %v485 = vpack.c.bf16 %v474, %v473
      %v486 = vpack.c.bf16 %v476, %v475
      %v487 = vpack.c.bf16 %v478, %v477
      %v488 = vpack.c.bf16 %v480, %v479
      %489 = vst.msk [vmem:[#allocation3] sm:$0xff] %vm397, %v481
      %490 = vst.msk [vmem:[#allocation3 + $0x8] sm:$0xff] %vm397, %v482
      %491 = vst.msk [vmem:[#allocation3 + $0x10] sm:$0xff] %vm397, %v483
      %492 = vst.msk [vmem:[#allocation3 + $0x18] sm:$0xff] %vm397, %v484
      %493 = vst.msk [vmem:[#allocation3 + $0x20] sm:$0xff] %vm397, %v485
      %494 = vst.msk [vmem:[#allocation3 + $0x28] sm:$0xff] %vm397, %v486
      %495 = vst.msk [vmem:[#allocation3 + $0x30] sm:$0xff] %vm397, %v487
      %496 = vst.msk [vmem:[#allocation3 + $0x38] sm:$0xff] %vm397, %v488
      %v497 = vld [vmem:[#allocation2 + $0x2] sm:$0xff]
      %v498 = vld [vmem:[#allocation2 + $0xa] sm:$0xff]
      %v499 = vld [vmem:[#allocation2 + $0x1a] sm:$0xff]
      %v500 = vld [vmem:[#allocation2 + $0x22] sm:$0xff]
      %v501 = vld [vmem:[#allocation2 + $0x32] sm:$0xff]
      %v502 = vld [vmem:[#allocation2 + $0x3a] sm:$0xff]
      %v503 = vld [vmem:[#allocation2 + $0x4a] sm:$0xff]
      %v504 = vld [vmem:[#allocation2 + $0x52] sm:$0xff]
      %v505 = vld [vmem:[#allocation2 + $0x62] sm:$0xff]
      %v506 = vld [vmem:[#allocation2 + $0x6a] sm:$0xff]
      %v507 = vld [vmem:[#allocation2 + $0x7a] sm:$0xff]
      %v508 = vld [vmem:[#allocation2 + $0x82] sm:$0xff]
      %v509 = vld [vmem:[#allocation2 + $0x92] sm:$0xff]
      %v510 = vld [vmem:[#allocation2 + $0x9a] sm:$0xff]
      %v511 = vld [vmem:[#allocation2 + $0xaa] sm:$0xff]
      %v512 = vld [vmem:[#allocation2 + $0xb2] sm:$0xff]
      %v513 = vpack.c.bf16 %v498, %v497
      %v514 = vpack.c.bf16 %v500, %v499
      %v515 = vpack.c.bf16 %v502, %v501
      %v516 = vpack.c.bf16 %v504, %v503
      %v517 = vpack.c.bf16 %v506, %v505
      %v518 = vpack.c.bf16 %v508, %v507
      %v519 = vpack.c.bf16 %v510, %v509
      %v520 = vpack.c.bf16 %v512, %v511
      %529 = vrot.lane.b32.xlu0 %v513, 4
      %v530 = vpop.permute.xlu0 %529
      %531 = vrot.lane.b32.xlu0 %v514, 4
      %v532 = vpop.permute.xlu0 %531
      %533 = vrot.lane.b32.xlu0 %v515, 4
      %v534 = vpop.permute.xlu0 %533
      %535 = vrot.lane.b32.xlu0 %v516, 4
      %v536 = vpop.permute.xlu0 %535
      %537 = vrot.lane.b32.xlu0 %v517, 4
      %v538 = vpop.permute.xlu0 %537
      %539 = vrot.lane.b32.xlu0 %v518, 4
      %v540 = vpop.permute.xlu0 %539
      %541 = vrot.lane.b32.xlu0 %v519, 4
      %v542 = vpop.permute.xlu0 %541
      %543 = vrot.lane.b32.xlu0 %v520, 4
      %v544 = vpop.permute.xlu0 %543
      %vm553 = vcmask 64544
      %554 = vst.msk [vmem:[#allocation3] sm:$0xff] %vm553, %v530
      %555 = vst.msk [vmem:[#allocation3 + $0x8] sm:$0xff] %vm553, %v532
      %556 = vst.msk [vmem:[#allocation3 + $0x10] sm:$0xff] %vm553, %v534
      %557 = vst.msk [vmem:[#allocation3 + $0x18] sm:$0xff] %vm553, %v536
      %558 = vst.msk [vmem:[#allocation3 + $0x20] sm:$0xff] %vm553, %v538
      %559 = vst.msk [vmem:[#allocation3 + $0x28] sm:$0xff] %vm553, %v540
      %560 = vst.msk [vmem:[#allocation3 + $0x30] sm:$0xff] %vm553, %v542
      %561 = vst.msk [vmem:[#allocation3 + $0x38] sm:$0xff] %vm553, %v544
      %v562 = vld [vmem:[#allocation2 + $0x4] sm:$0xff]
      %v563 = vld [vmem:[#allocation2 + $0xc] sm:$0xff]
      %v564 = vld [vmem:[#allocation2 + $0x1c] sm:$0xff]
      %v565 = vld [vmem:[#allocation2 + $0x24] sm:$0xff]
      %v566 = vld [vmem:[#allocation2 + $0x34] sm:$0xff]
      %v567 = vld [vmem:[#allocation2 + $0x3c] sm:$0xff]
      %v568 = vld [vmem:[#allocation2 + $0x4c] sm:$0xff]
      %v569 = vld [vmem:[#allocation2 + $0x54] sm:$0xff]
      %v570 = vld [vmem:[#allocation2 + $0x64] sm:$0xff]
      %v571 = vld [vmem:[#allocation2 + $0x6c] sm:$0xff]
      %v572 = vld [vmem:[#allocation2 + $0x7c] sm:$0xff]
      %v573 = vld [vmem:[#allocation2 + $0x84] sm:$0xff]
      %v574 = vld [vmem:[#allocation2 + $0x94] sm:$0xff]
      %v575 = vld [vmem:[#allocation2 + $0x9c] sm:$0xff]
      %v576 = vld [vmem:[#allocation2 + $0xac] sm:$0xff]
      %v577 = vld [vmem:[#allocation2 + $0xb4] sm:$0xff]
      %v578 = vpack.c.bf16 %v563, %v562
      %v579 = vpack.c.bf16 %v565, %v564
      %v580 = vpack.c.bf16 %v567, %v566
      %v581 = vpack.c.bf16 %v569, %v568
      %v582 = vpack.c.bf16 %v571, %v570
      %v583 = vpack.c.bf16 %v573, %v572
      %v584 = vpack.c.bf16 %v575, %v574
      %v585 = vpack.c.bf16 %v577, %v576
      %594 = vrot.lane.b32.xlu0 %v578, 8
      %v595 = vpop.permute.xlu0 %594
      %596 = vrot.lane.b32.xlu0 %v579, 8
      %v597 = vpop.permute.xlu0 %596
      %598 = vrot.lane.b32.xlu0 %v580, 8
      %v599 = vpop.permute.xlu0 %598
      %600 = vrot.lane.b32.xlu0 %v581, 8
      %v601 = vpop.permute.xlu0 %600
      %602 = vrot.lane.b32.xlu0 %v582, 8
      %v603 = vpop.permute.xlu0 %602
      %604 = vrot.lane.b32.xlu0 %v583, 8
      %v605 = vpop.permute.xlu0 %604
      %606 = vrot.lane.b32.xlu0 %v584, 8
      %v607 = vpop.permute.xlu0 %606
      %608 = vrot.lane.b32.xlu0 %v585, 8
      %v609 = vpop.permute.xlu0 %608
      %vm618 = vcmask 97344
      %619 = vst.msk [vmem:[#allocation3] sm:$0xff] %vm618, %v595
      %620 = vst.msk [vmem:[#allocation3 + $0x8] sm:$0xff] %vm618, %v597
      %621 = vst.msk [vmem:[#allocation3 + $0x10] sm:$0xff] %vm618, %v599
      %622 = vst.msk [vmem:[#allocation3 + $0x18] sm:$0xff] %vm618, %v601
      %623 = vst.msk [vmem:[#allocation3 + $0x20] sm:$0xff] %vm618, %v603
      %624 = vst.msk [vmem:[#allocation3 + $0x28] sm:$0xff] %vm618, %v605
      %625 = vst.msk [vmem:[#allocation3 + $0x30] sm:$0xff] %vm618, %v607
      %626 = vst.msk [vmem:[#allocation3 + $0x38] sm:$0xff] %vm618, %v609
      %s627 = scalar_lea.vmem [#allocation2], 24
      %v628 = vld [vmem:[%s627 + $0x1] sm:$0xff]
      %v629 = vld [vmem:[%s627 + $0x9] sm:$0xff]
      %v630 = vld [vmem:[%s627 + $0x19] sm:$0xff]
      %v631 = vld [vmem:[%s627 + $0x21] sm:$0xff]
      %v632 = vld [vmem:[%s627 + $0x31] sm:$0xff]
      %v633 = vld [vmem:[%s627 + $0x39] sm:$0xff]
      %v634 = vld [vmem:[%s627 + $0x49] sm:$0xff]
      %v635 = vld [vmem:[%s627 + $0x51] sm:$0xff]
      %v636 = vld [vmem:[%s627 + $0x61] sm:$0xff]
      %v637 = vld [vmem:[%s627 + $0x69] sm:$0xff]
      %v638 = vld [vmem:[%s627 + $0x79] sm:$0xff]
      %v639 = vld [vmem:[%s627 + $0x81] sm:$0xff]
      %v640 = vld [vmem:[%s627 + $0x91] sm:$0xff]
      %v641 = vld [vmem:[%s627 + $0x99] sm:$0xff]
      %v642 = vld [vmem:[%s627 + $0xa9] sm:$0xff]
      %v643 = vld [vmem:[%s627 + $0xb1] sm:$0xff]
      %v644 = vpack.c.bf16 %v629, %v628
      %v645 = vpack.c.bf16 %v631, %v630
      %v646 = vpack.c.bf16 %v633, %v632
      %v647 = vpack.c.bf16 %v635, %v634
      %v648 = vpack.c.bf16 %v637, %v636
      %v649 = vpack.c.bf16 %v639, %v638
      %v650 = vpack.c.bf16 %v641, %v640
      %v651 = vpack.c.bf16 %v643, %v642
      %660 = vrot.lane.b32.xlu0 %v644, 12
      %v661 = vpop.permute.xlu0 %660
      %662 = vrot.lane.b32.xlu0 %v645, 12
      %v663 = vpop.permute.xlu0 %662
      %664 = vrot.lane.b32.xlu0 %v646, 12
      %v665 = vpop.permute.xlu0 %664
      %666 = vrot.lane.b32.xlu0 %v647, 12
      %v667 = vpop.permute.xlu0 %666
      %668 = vrot.lane.b32.xlu0 %v648, 12
      %v669 = vpop.permute.xlu0 %668
      %670 = vrot.lane.b32.xlu0 %v649, 12
      %v671 = vpop.permute.xlu0 %670
      %672 = vrot.lane.b32.xlu0 %v650, 12
      %v673 = vpop.permute.xlu0 %672
      %674 = vrot.lane.b32.xlu0 %v651, 12
      %v675 = vpop.permute.xlu0 %674
      %vm684 = vcmask 130144
      %685 = vst.msk [vmem:[#allocation3] sm:$0xff] %vm684, %v661
      %686 = vst.msk [vmem:[#allocation3 + $0x8] sm:$0xff] %vm684, %v663
      %687 = vst.msk [vmem:[#allocation3 + $0x10] sm:$0xff] %vm684, %v665
      %688 = vst.msk [vmem:[#allocation3 + $0x18] sm:$0xff] %vm684, %v667
      %689 = vst.msk [vmem:[#allocation3 + $0x20] sm:$0xff] %vm684, %v669
      %690 = vst.msk [vmem:[#allocation3 + $0x28] sm:$0xff] %vm684, %v671
      %691 = vst.msk [vmem:[#allocation3 + $0x30] sm:$0xff] %vm684, %v673
      %692 = vst.msk [vmem:[#allocation3 + $0x38] sm:$0xff] %vm684, %v675
      %v693 = vld [vmem:[%s627 + $0x2] sm:$0xff]
      %v694 = vld [vmem:[%s627 + $0xa] sm:$0xff]
      %v695 = vld [vmem:[%s627 + $0x1a] sm:$0xff]
      %v696 = vld [vmem:[%s627 + $0x22] sm:$0xff]
      %v697 = vld [vmem:[%s627 + $0x32] sm:$0xff]
      %v698 = vld [vmem:[%s627 + $0x3a] sm:$0xff]
      %v699 = vld [vmem:[%s627 + $0x4a] sm:$0xff]
      %v700 = vld [vmem:[%s627 + $0x52] sm:$0xff]
      %v701 = vld [vmem:[%s627 + $0x62] sm:$0xff]
      %v702 = vld [vmem:[%s627 + $0x6a] sm:$0xff]
      %v703 = vld [vmem:[%s627 + $0x7a] sm:$0xff]
      %v704 = vld [vmem:[%s627 + $0x82] sm:$0xff]
      %v705 = vld [vmem:[%s627 + $0x92] sm:$0xff]
      %v706 = vld [vmem:[%s627 + $0x9a] sm:$0xff]
      %v707 = vld [vmem:[%s627 + $0xaa] sm:$0xff]
      %v708 = vld [vmem:[%s627 + $0xb2] sm:$0xff]
      %v709 = vpack.c.bf16 %v694, %v693
      %v710 = vpack.c.bf16 %v696, %v695
      %v711 = vpack.c.bf16 %v698, %v697
      %v712 = vpack.c.bf16 %v700, %v699
      %v713 = vpack.c.bf16 %v702, %v701
      %v714 = vpack.c.bf16 %v704, %v703
      %v715 = vpack.c.bf16 %v706, %v705
      %v716 = vpack.c.bf16 %v708, %v707
      %725 = vrot.lane.b32.xlu0 %v709, 16
      %v726 = vpop.permute.xlu0 %725
      %727 = vrot.lane.b32.xlu0 %v710, 16
      %v728 = vpop.permute.xlu0 %727
      %729 = vrot.lane.b32.xlu0 %v711, 16
      %v730 = vpop.permute.xlu0 %729
      %731 = vrot.lane.b32.xlu0 %v712, 16
      %v732 = vpop.permute.xlu0 %731
      %733 = vrot.lane.b32.xlu0 %v713, 16
      %v734 = vpop.permute.xlu0 %733
      %735 = vrot.lane.b32.xlu0 %v714, 16
      %v736 = vpop.permute.xlu0 %735
      %737 = vrot.lane.b32.xlu0 %v715, 16
      %v738 = vpop.permute.xlu0 %737
      %739 = vrot.lane.b32.xlu0 %v716, 16
      %v740 = vpop.permute.xlu0 %739
      %vm749 = vcmask 162944
      %750 = vst.msk [vmem:[#allocation3] sm:$0xff] %vm749, %v726
      %751 = vst.msk [vmem:[#allocation3 + $0x8] sm:$0xff] %vm749, %v728
      %752 = vst.msk [vmem:[#allocation3 + $0x10] sm:$0xff] %vm749, %v730
      %753 = vst.msk [vmem:[#allocation3 + $0x18] sm:$0xff] %vm749, %v732
      %754 = vst.msk [vmem:[#allocation3 + $0x20] sm:$0xff] %vm749, %v734
      %755 = vst.msk [vmem:[#allocation3 + $0x28] sm:$0xff] %vm749, %v736
      %756 = vst.msk [vmem:[#allocation3 + $0x30] sm:$0xff] %vm749, %v738
      %757 = vst.msk [vmem:[#allocation3 + $0x38] sm:$0xff] %vm749, %v740
      %v758 = vld [vmem:[%s627 + $0x3] sm:$0xff]
      %v759 = vld [vmem:[%s627 + $0xb] sm:$0xff]
      %v760 = vld [vmem:[%s627 + $0x1b] sm:$0xff]
      %v761 = vld [vmem:[%s627 + $0x23] sm:$0xff]
      %v762 = vld [vmem:[%s627 + $0x33] sm:$0xff]
      %v763 = vld [vmem:[%s627 + $0x3b] sm:$0xff]
      %v764 = vld [vmem:[%s627 + $0x4b] sm:$0xff]
      %v765 = vld [vmem:[%s627 + $0x53] sm:$0xff]
      %v766 = vld [vmem:[%s627 + $0x63] sm:$0xff]
      %v767 = vld [vmem:[%s627 + $0x6b] sm:$0xff]
      %v768 = vld [vmem:[%s627 + $0x7b] sm:$0xff]
      %v769 = vld [vmem:[%s627 + $0x83] sm:$0xff]
      %v770 = vld [vmem:[%s627 + $0x93] sm:$0xff]
      %v771 = vld [vmem:[%s627 + $0x9b] sm:$0xff]
      %v772 = vld [vmem:[%s627 + $0xab] sm:$0xff]
      %v773 = vld [vmem:[%s627 + $0xb3] sm:$0xff]
      %v774 = vpack.c.bf16 %v759, %v758
      %v775 = vpack.c.bf16 %v761, %v760
      %v776 = vpack.c.bf16 %v763, %v762
      %v777 = vpack.c.bf16 %v765, %v764
      %v778 = vpack.c.bf16 %v767, %v766
      %v779 = vpack.c.bf16 %v769, %v768
      %v780 = vpack.c.bf16 %v771, %v770
      %v781 = vpack.c.bf16 %v773, %v772
      %790 = vrot.lane.b32.xlu0 %v774, 20
      %v791 = vpop.permute.xlu0 %790
      %792 = vrot.lane.b32.xlu0 %v775, 20
      %v793 = vpop.permute.xlu0 %792
      %794 = vrot.lane.b32.xlu0 %v776, 20
      %v795 = vpop.permute.xlu0 %794
      %796 = vrot.lane.b32.xlu0 %v777, 20
      %v797 = vpop.permute.xlu0 %796
      %798 = vrot.lane.b32.xlu0 %v778, 20
      %v799 = vpop.permute.xlu0 %798
      %800 = vrot.lane.b32.xlu0 %v779, 20
      %v801 = vpop.permute.xlu0 %800
      %802 = vrot.lane.b32.xlu0 %v780, 20
      %v803 = vpop.permute.xlu0 %802
      %804 = vrot.lane.b32.xlu0 %v781, 20
      %v805 = vpop.permute.xlu0 %804
      %vm814 = vcmask 195744
      %815 = vst.msk [vmem:[#allocation3] sm:$0xff] %vm814, %v791
      %816 = vst.msk [vmem:[#allocation3 + $0x8] sm:$0xff] %vm814, %v793
      %817 = vst.msk [vmem:[#allocation3 + $0x10] sm:$0xff] %vm814, %v795
      %818 = vst.msk [vmem:[#allocation3 + $0x18] sm:$0xff] %vm814, %v797
      %819 = vst.msk [vmem:[#allocation3 + $0x20] sm:$0xff] %vm814, %v799
      %820 = vst.msk [vmem:[#allocation3 + $0x28] sm:$0xff] %vm814, %v801
      %821 = vst.msk [vmem:[#allocation3 + $0x30] sm:$0xff] %vm814, %v803
      %822 = vst.msk [vmem:[#allocation3 + $0x38] sm:$0xff] %vm814, %v805
      %v823 = vld [vmem:[%s448] sm:$0xff]
      %v824 = vld [vmem:[%s448 + $0x8] sm:$0xff]
      %v825 = vld [vmem:[%s448 + $0x18] sm:$0xff]
      %v826 = vld [vmem:[%s448 + $0x20] sm:$0xff]
      %v827 = vld [vmem:[%s448 + $0x30] sm:$0xff]
      %v828 = vld [vmem:[%s448 + $0x38] sm:$0xff]
      %v829 = vld [vmem:[%s448 + $0x48] sm:$0xff]
      %v830 = vld [vmem:[%s448 + $0x50] sm:$0xff]
      %v831 = vld [vmem:[%s448 + $0x60] sm:$0xff]
      %v832 = vld [vmem:[%s448 + $0x68] sm:$0xff]
      %v833 = vld [vmem:[%s448 + $0x78] sm:$0xff]
      %v834 = vld [vmem:[%s448 + $0x80] sm:$0xff]
      %v835 = vld [vmem:[%s448 + $0x90] sm:$0xff]
      %v836 = vld [vmem:[%s448 + $0x98] sm:$0xff]
      %v837 = vld [vmem:[%s448 + $0xa8] sm:$0xff]
      %v838 = vld [vmem:[%s448 + $0xb0] sm:$0xff]
      %v839 = vpack.c.bf16 %v824, %v823
      %v840 = vpack.c.bf16 %v826, %v825
      %v841 = vpack.c.bf16 %v828, %v827
      %v842 = vpack.c.bf16 %v830, %v829
      %v843 = vpack.c.bf16 %v832, %v831
      %v844 = vpack.c.bf16 %v834, %v833
      %v845 = vpack.c.bf16 %v836, %v835
      %v846 = vpack.c.bf16 %v838, %v837
      %855 = vrot.lane.b32.xlu0 %v839, 24
      %v856 = vpop.permute.xlu0 %855
      %857 = vrot.lane.b32.xlu0 %v840, 24
      %v858 = vpop.permute.xlu0 %857
      %859 = vrot.lane.b32.xlu0 %v841, 24
      %v860 = vpop.permute.xlu0 %859
      %861 = vrot.lane.b32.xlu0 %v842, 24
      %v862 = vpop.permute.xlu0 %861
      %863 = vrot.lane.b32.xlu0 %v843, 24
      %v864 = vpop.permute.xlu0 %863
      %865 = vrot.lane.b32.xlu0 %v844, 24
      %v866 = vpop.permute.xlu0 %865
      %867 = vrot.lane.b32.xlu0 %v845, 24
      %v868 = vpop.permute.xlu0 %867
      %869 = vrot.lane.b32.xlu0 %v846, 24
      %v870 = vpop.permute.xlu0 %869
      %vm879 = vcmask 228544
      %880 = vst.msk [vmem:[#allocation3] sm:$0xff] %vm879, %v856
      %881 = vst.msk [vmem:[#allocation3 + $0x8] sm:$0xff] %vm879, %v858
      %882 = vst.msk [vmem:[#allocation3 + $0x10] sm:$0xff] %vm879, %v860
      %883 = vst.msk [vmem:[#allocation3 + $0x18] sm:$0xff] %vm879, %v862
      %884 = vst.msk [vmem:[#allocation3 + $0x20] sm:$0xff] %vm879, %v864
      %885 = vst.msk [vmem:[#allocation3 + $0x28] sm:$0xff] %vm879, %v866
      %886 = vst.msk [vmem:[#allocation3 + $0x30] sm:$0xff] %vm879, %v868
      %887 = vst.msk [vmem:[#allocation3 + $0x38] sm:$0xff] %vm879, %v870
      %v888 = vld [vmem:[%s448 + $0x1] sm:$0xff]
      %v889 = vld [vmem:[%s448 + $0x9] sm:$0xff]
      %v890 = vld [vmem:[%s448 + $0x19] sm:$0xff]
      %v891 = vld [vmem:[%s448 + $0x21] sm:$0xff]
      %v892 = vld [vmem:[%s448 + $0x31] sm:$0xff]
      %v893 = vld [vmem:[%s448 + $0x39] sm:$0xff]
      %v894 = vld [vmem:[%s448 + $0x49] sm:$0xff]
      %v895 = vld [vmem:[%s448 + $0x51] sm:$0xff]
      %v896 = vld [vmem:[%s448 + $0x61] sm:$0xff]
      %v897 = vld [vmem:[%s448 + $0x69] sm:$0xff]
      %v898 = vld [vmem:[%s448 + $0x79] sm:$0xff]
      %v899 = vld [vmem:[%s448 + $0x81] sm:$0xff]
      %v900 = vld [vmem:[%s448 + $0x91] sm:$0xff]
      %v901 = vld [vmem:[%s448 + $0x99] sm:$0xff]
      %v902 = vld [vmem:[%s448 + $0xa9] sm:$0xff]
      %v903 = vld [vmem:[%s448 + $0xb1] sm:$0xff]
      %v904 = vpack.c.bf16 %v889, %v888
      %v905 = vpack.c.bf16 %v891, %v890
      %v906 = vpack.c.bf16 %v893, %v892
      %v907 = vpack.c.bf16 %v895, %v894
      %v908 = vpack.c.bf16 %v897, %v896
      %v909 = vpack.c.bf16 %v899, %v898
      %v910 = vpack.c.bf16 %v901, %v900
      %v911 = vpack.c.bf16 %v903, %v902
      %920 = vrot.lane.b32.xlu0 %v904, 28
      %v921 = vpop.permute.xlu0 %920
      %922 = vrot.lane.b32.xlu0 %v905, 28
      %v923 = vpop.permute.xlu0 %922
      %924 = vrot.lane.b32.xlu0 %v906, 28
      %v925 = vpop.permute.xlu0 %924
      %926 = vrot.lane.b32.xlu0 %v907, 28
      %v927 = vpop.permute.xlu0 %926
      %928 = vrot.lane.b32.xlu0 %v908, 28
      %v929 = vpop.permute.xlu0 %928
      %930 = vrot.lane.b32.xlu0 %v909, 28
      %v931 = vpop.permute.xlu0 %930
      %932 = vrot.lane.b32.xlu0 %v910, 28
      %v933 = vpop.permute.xlu0 %932
      %934 = vrot.lane.b32.xlu0 %v911, 28
      %v935 = vpop.permute.xlu0 %934
      %vm944 = vcmask 261344
      %945 = vst.msk [vmem:[#allocation3] sm:$0xff] %vm944, %v921
      %946 = vst.msk [vmem:[#allocation3 + $0x8] sm:$0xff] %vm944, %v923
      %947 = vst.msk [vmem:[#allocation3 + $0x10] sm:$0xff] %vm944, %v925
      %948 = vst.msk [vmem:[#allocation3 + $0x18] sm:$0xff] %vm944, %v927
      %949 = vst.msk [vmem:[#allocation3 + $0x20] sm:$0xff] %vm944, %v929
      %950 = vst.msk [vmem:[#allocation3 + $0x28] sm:$0xff] %vm944, %v931
      %951 = vst.msk [vmem:[#allocation3 + $0x30] sm:$0xff] %vm944, %v933
      %952 = vst.msk [vmem:[#allocation3 + $0x38] sm:$0xff] %vm944, %v935
      %v953 = vld [vmem:[%s448 + $0x2] sm:$0xff]
      %v954 = vld [vmem:[%s448 + $0xa] sm:$0xff]
      %v955 = vld [vmem:[%s448 + $0x1a] sm:$0xff]
      %v956 = vld [vmem:[%s448 + $0x22] sm:$0xff]
      %v957 = vld [vmem:[%s448 + $0x32] sm:$0xff]
      %v958 = vld [vmem:[%s448 + $0x3a] sm:$0xff]
      %v959 = vld [vmem:[%s448 + $0x4a] sm:$0xff]
      %v960 = vld [vmem:[%s448 + $0x52] sm:$0xff]
      %v961 = vld [vmem:[%s448 + $0x62] sm:$0xff]
      %v962 = vld [vmem:[%s448 + $0x6a] sm:$0xff]
      %v963 = vld [vmem:[%s448 + $0x7a] sm:$0xff]
      %v964 = vld [vmem:[%s448 + $0x82] sm:$0xff]
      %v965 = vld [vmem:[%s448 + $0x92] sm:$0xff]
      %v966 = vld [vmem:[%s448 + $0x9a] sm:$0xff]
      %v967 = vld [vmem:[%s448 + $0xaa] sm:$0xff]
      %v968 = vld [vmem:[%s448 + $0xb2] sm:$0xff]
      %v969 = vpack.c.bf16 %v954, %v953
      %v970 = vpack.c.bf16 %v956, %v955
      %v971 = vpack.c.bf16 %v958, %v957
      %v972 = vpack.c.bf16 %v960, %v959
      %v973 = vpack.c.bf16 %v962, %v961
      %v974 = vpack.c.bf16 %v964, %v963
      %v975 = vpack.c.bf16 %v966, %v965
      %v976 = vpack.c.bf16 %v968, %v967
      %985 = vrot.lane.b32.xlu0 %v969, 32
      %v986 = vpop.permute.xlu0 %985
      %987 = vrot.lane.b32.xlu0 %v970, 32
      %v988 = vpop.permute.xlu0 %987
      %989 = vrot.lane.b32.xlu0 %v971, 32
      %v990 = vpop.permute.xlu0 %989
      %991 = vrot.lane.b32.xlu0 %v972, 32
      %v992 = vpop.permute.xlu0 %991
      %993 = vrot.lane.b32.xlu0 %v973, 32
      %v994 = vpop.permute.xlu0 %993
      %995 = vrot.lane.b32.xlu0 %v974, 32
      %v996 = vpop.permute.xlu0 %995
      %997 = vrot.lane.b32.xlu0 %v975, 32
      %v998 = vpop.permute.xlu0 %997
      %999 = vrot.lane.b32.xlu0 %v976, 32
      %v1000 = vpop.permute.xlu0 %999
      %vm1009 = vcmask 294144
      %1010 = vst.msk [vmem:[#allocation3] sm:$0xff] %vm1009, %v986
      %1011 = vst.msk [vmem:[#allocation3 + $0x8] sm:$0xff] %vm1009, %v988
      %1012 = vst.msk [vmem:[#allocation3 + $0x10] sm:$0xff] %vm1009, %v990
      %1013 = vst.msk [vmem:[#allocation3 + $0x18] sm:$0xff] %vm1009, %v992
      %1014 = vst.msk [vmem:[#allocation3 + $0x20] sm:$0xff] %vm1009, %v994
      %1015 = vst.msk [vmem:[#allocation3 + $0x28] sm:$0xff] %vm1009, %v996
      %1016 = vst.msk [vmem:[#allocation3 + $0x30] sm:$0xff] %vm1009, %v998
      %1017 = vst.msk [vmem:[#allocation3 + $0x38] sm:$0xff] %vm1009, %v1000
      %v1018 = vld [vmem:[%s448 + $0x3] sm:$0xff]
      %v1019 = vld [vmem:[%s448 + $0xb] sm:$0xff]
      %v1020 = vld [vmem:[%s448 + $0x1b] sm:$0xff]
      %v1021 = vld [vmem:[%s448 + $0x23] sm:$0xff]
      %v1022 = vld [vmem:[%s448 + $0x33] sm:$0xff]
      %v1023 = vld [vmem:[%s448 + $0x3b] sm:$0xff]
      %v1024 = vld [vmem:[%s448 + $0x4b] sm:$0xff]
      %v1025 = vld [vmem:[%s448 + $0x53] sm:$0xff]
      %v1026 = vld [vmem:[%s448 + $0x63] sm:$0xff]
      %v1027 = vld [vmem:[%s448 + $0x6b] sm:$0xff]
      %v1028 = vld [vmem:[%s448 + $0x7b] sm:$0xff]
      %v1029 = vld [vmem:[%s448 + $0x83] sm:$0xff]
      %v1030 = vld [vmem:[%s448 + $0x93] sm:$0xff]
      %v1031 = vld [vmem:[%s448 + $0x9b] sm:$0xff]
      %v1032 = vld [vmem:[%s448 + $0xab] sm:$0xff]
      %v1033 = vld [vmem:[%s448 + $0xb3] sm:$0xff]
      %v1034 = vpack.c.bf16 %v1019, %v1018
      %v1035 = vpack.c.bf16 %v1021, %v1020
      %v1036 = vpack.c.bf16 %v1023, %v1022
      %v1037 = vpack.c.bf16 %v1025, %v1024
      %v1038 = vpack.c.bf16 %v1027, %v1026
      %v1039 = vpack.c.bf16 %v1029, %v1028
      %v1040 = vpack.c.bf16 %v1031, %v1030
      %v1041 = vpack.c.bf16 %v1033, %v1032
      %1050 = vrot.lane.b32.xlu0 %v1034, 36
      %v1051 = vpop.permute.xlu0 %1050
      %1052 = vrot.lane.b32.xlu0 %v1035, 36
      %v1053 = vpop.permute.xlu0 %1052
      %1054 = vrot.lane.b32.xlu0 %v1036, 36
      %v1055 = vpop.permute.xlu0 %1054
      %1056 = vrot.lane.b32.xlu0 %v1037, 36
      %v1057 = vpop.permute.xlu0 %1056
      %1058 = vrot.lane.b32.xlu0 %v1038, 36
      %v1059 = vpop.permute.xlu0 %1058
      %1060 = vrot.lane.b32.xlu0 %v1039, 36
      %v1061 = vpop.permute.xlu0 %1060
      %1062 = vrot.lane.b32.xlu0 %v1040, 36
      %v1063 = vpop.permute.xlu0 %1062
      %1064 = vrot.lane.b32.xlu0 %v1041, 36
      %v1065 = vpop.permute.xlu0 %1064
      %vm1074 = vcmask 326944
      %1075 = vst.msk [vmem:[#allocation3] sm:$0xff] %vm1074, %v1051
      %1076 = vst.msk [vmem:[#allocation3 + $0x8] sm:$0xff] %vm1074, %v1053
      %1077 = vst.msk [vmem:[#allocation3 + $0x10] sm:$0xff] %vm1074, %v1055
      %1078 = vst.msk [vmem:[#allocation3 + $0x18] sm:$0xff] %vm1074, %v1057
      %1079 = vst.msk [vmem:[#allocation3 + $0x20] sm:$0xff] %vm1074, %v1059
      %1080 = vst.msk [vmem:[#allocation3 + $0x28] sm:$0xff] %vm1074, %v1061
      %1081 = vst.msk [vmem:[#allocation3 + $0x30] sm:$0xff] %vm1074, %v1063
      %1082 = vst.msk [vmem:[#allocation3 + $0x38] sm:$0xff] %vm1074, %v1065
      %v1083 = vld [vmem:[%s448 + $0x4] sm:$0xff]
      %v1084 = vld [vmem:[%s448 + $0xc] sm:$0xff]
      %v1085 = vld [vmem:[%s448 + $0x1c] sm:$0xff]
      %v1086 = vld [vmem:[%s448 + $0x24] sm:$0xff]
      %v1087 = vld [vmem:[%s448 + $0x34] sm:$0xff]
      %v1088 = vld [vmem:[%s448 + $0x3c] sm:$0xff]
      %v1089 = vld [vmem:[%s448 + $0x4c] sm:$0xff]
      %v1090 = vld [vmem:[%s448 + $0x54] sm:$0xff]
      %v1091 = vld [vmem:[%s448 + $0x64] sm:$0xff]
      %v1092 = vld [vmem:[%s448 + $0x6c] sm:$0xff]
      %v1093 = vld [vmem:[%s448 + $0x7c] sm:$0xff]
      %v1094 = vld [vmem:[%s448 + $0x84] sm:$0xff]
      %v1095 = vld [vmem:[%s448 + $0x94] sm:$0xff]
      %v1096 = vld [vmem:[%s448 + $0x9c] sm:$0xff]
      %v1097 = vld [vmem:[%s448 + $0xac] sm:$0xff]
      %v1098 = vld [vmem:[%s448 + $0xb4] sm:$0xff]
      %v1099 = vpack.c.bf16 %v1084, %v1083
      %v1100 = vpack.c.bf16 %v1086, %v1085
      %v1101 = vpack.c.bf16 %v1088, %v1087
      %v1102 = vpack.c.bf16 %v1090, %v1089
      %v1103 = vpack.c.bf16 %v1092, %v1091
      %v1104 = vpack.c.bf16 %v1094, %v1093
      %v1105 = vpack.c.bf16 %v1096, %v1095
      %v1106 = vpack.c.bf16 %v1098, %v1097
      %1115 = vrot.lane.b32.xlu0 %v1099, 40
      %v1116 = vpop.permute.xlu0 %1115
      %1117 = vrot.lane.b32.xlu0 %v1100, 40
      %v1118 = vpop.permute.xlu0 %1117
      %1119 = vrot.lane.b32.xlu0 %v1101, 40
      %v1120 = vpop.permute.xlu0 %1119
      %1121 = vrot.lane.b32.xlu0 %v1102, 40
      %v1122 = vpop.permute.xlu0 %1121
      %1123 = vrot.lane.b32.xlu0 %v1103, 40
      %v1124 = vpop.permute.xlu0 %1123
      %1125 = vrot.lane.b32.xlu0 %v1104, 40
      %v1126 = vpop.permute.xlu0 %1125
      %1127 = vrot.lane.b32.xlu0 %v1105, 40
      %v1128 = vpop.permute.xlu0 %1127
      %1129 = vrot.lane.b32.xlu0 %v1106, 40
      %v1130 = vpop.permute.xlu0 %1129
      %vm1139 = vcmask 359744
      %1140 = vst.msk [vmem:[#allocation3] sm:$0xff] %vm1139, %v1116
      %1141 = vst.msk [vmem:[#allocation3 + $0x8] sm:$0xff] %vm1139, %v1118
      %1142 = vst.msk [vmem:[#allocation3 + $0x10] sm:$0xff] %vm1139, %v1120
      %1143 = vst.msk [vmem:[#allocation3 + $0x18] sm:$0xff] %vm1139, %v1122
      %1144 = vst.msk [vmem:[#allocation3 + $0x20] sm:$0xff] %vm1139, %v1124
      %1145 = vst.msk [vmem:[#allocation3 + $0x28] sm:$0xff] %vm1139, %v1126
      %1146 = vst.msk [vmem:[#allocation3 + $0x30] sm:$0xff] %vm1139, %v1128
      %1147 = vst.msk [vmem:[#allocation3 + $0x38] sm:$0xff] %vm1139, %v1130
      %s1148 = scalar_lea.vmem [#allocation2], 72
      %v1149 = vld [vmem:[%s1148 + $0x1] sm:$0xff]
      %v1150 = vld [vmem:[%s1148 + $0x9] sm:$0xff]
      %v1151 = vld [vmem:[%s1148 + $0x19] sm:$0xff]
      %v1152 = vld [vmem:[%s1148 + $0x21] sm:$0xff]
      %v1153 = vld [vmem:[%s1148 + $0x31] sm:$0xff]
      %v1154 = vld [vmem:[%s1148 + $0x39] sm:$0xff]
      %v1155 = vld [vmem:[%s1148 + $0x49] sm:$0xff]
      %v1156 = vld [vmem:[%s1148 + $0x51] sm:$0xff]
      %v1157 = vld [vmem:[%s1148 + $0x61] sm:$0xff]
      %v1158 = vld [vmem:[%s1148 + $0x69] sm:$0xff]
      %v1159 = vld [vmem:[%s1148 + $0x79] sm:$0xff]
      %v1160 = vld [vmem:[%s1148 + $0x81] sm:$0xff]
      %v1161 = vld [vmem:[%s1148 + $0x91] sm:$0xff]
      %v1162 = vld [vmem:[%s1148 + $0x99] sm:$0xff]
      %v1163 = vld [vmem:[%s1148 + $0xa9] sm:$0xff]
      %v1164 = vld [vmem:[%s1148 + $0xb1] sm:$0xff]
      %v1165 = vpack.c.bf16 %v1150, %v1149
      %v1166 = vpack.c.bf16 %v1152, %v1151
      %v1167 = vpack.c.bf16 %v1154, %v1153
      %v1168 = vpack.c.bf16 %v1156, %v1155
      %v1169 = vpack.c.bf16 %v1158, %v1157
      %v1170 = vpack.c.bf16 %v1160, %v1159
      %v1171 = vpack.c.bf16 %v1162, %v1161
      %v1172 = vpack.c.bf16 %v1164, %v1163
      %1181 = vrot.lane.b32.xlu0 %v1165, 44
      %v1182 = vpop.permute.xlu0 %1181
      %1183 = vrot.lane.b32.xlu0 %v1166, 44
      %v1184 = vpop.permute.xlu0 %1183
      %1185 = vrot.lane.b32.xlu0 %v1167, 44
      %v1186 = vpop.permute.xlu0 %1185
      %1187 = vrot.lane.b32.xlu0 %v1168, 44
      %v1188 = vpop.permute.xlu0 %1187
      %1189 = vrot.lane.b32.xlu0 %v1169, 44
      %v1190 = vpop.permute.xlu0 %1189
      %1191 = vrot.lane.b32.xlu0 %v1170, 44
      %v1192 = vpop.permute.xlu0 %1191
      %1193 = vrot.lane.b32.xlu0 %v1171, 44
      %v1194 = vpop.permute.xlu0 %1193
      %1195 = vrot.lane.b32.xlu0 %v1172, 44
      %v1196 = vpop.permute.xlu0 %1195
      %vm1205 = vcmask 392544
      %1206 = vst.msk [vmem:[#allocation3] sm:$0xff] %vm1205, %v1182
      %1207 = vst.msk [vmem:[#allocation3 + $0x8] sm:$0xff] %vm1205, %v1184
      %1208 = vst.msk [vmem:[#allocation3 + $0x10] sm:$0xff] %vm1205, %v1186
      %1209 = vst.msk [vmem:[#allocation3 + $0x18] sm:$0xff] %vm1205, %v1188
      %1210 = vst.msk [vmem:[#allocation3 + $0x20] sm:$0xff] %vm1205, %v1190
      %1211 = vst.msk [vmem:[#allocation3 + $0x28] sm:$0xff] %vm1205, %v1192
      %1212 = vst.msk [vmem:[#allocation3 + $0x30] sm:$0xff] %vm1205, %v1194
      %1213 = vst.msk [vmem:[#allocation3 + $0x38] sm:$0xff] %vm1205, %v1196
      %v1214 = vld [vmem:[%s1148 + $0x2] sm:$0xff]
      %v1215 = vld [vmem:[%s1148 + $0xa] sm:$0xff]
      %v1216 = vld [vmem:[%s1148 + $0x1a] sm:$0xff]
      %v1217 = vld [vmem:[%s1148 + $0x22] sm:$0xff]
      %v1218 = vld [vmem:[%s1148 + $0x32] sm:$0xff]
      %v1219 = vld [vmem:[%s1148 + $0x3a] sm:$0xff]
      %v1220 = vld [vmem:[%s1148 + $0x4a] sm:$0xff]
      %v1221 = vld [vmem:[%s1148 + $0x52] sm:$0xff]
      %v1222 = vld [vmem:[%s1148 + $0x62] sm:$0xff]
      %v1223 = vld [vmem:[%s1148 + $0x6a] sm:$0xff]
      %v1224 = vld [vmem:[%s1148 + $0x7a] sm:$0xff]
      %v1225 = vld [vmem:[%s1148 + $0x82] sm:$0xff]
      %v1226 = vld [vmem:[%s1148 + $0x92] sm:$0xff]
      %v1227 = vld [vmem:[%s1148 + $0x9a] sm:$0xff]
      %v1228 = vld [vmem:[%s1148 + $0xaa] sm:$0xff]
      %v1229 = vld [vmem:[%s1148 + $0xb2] sm:$0xff]
      %v1230 = vpack.c.bf16 %v1215, %v1214
      %v1231 = vpack.c.bf16 %v1217, %v1216
      %v1232 = vpack.c.bf16 %v1219, %v1218
      %v1233 = vpack.c.bf16 %v1221, %v1220
      %v1234 = vpack.c.bf16 %v1223, %v1222
      %v1235 = vpack.c.bf16 %v1225, %v1224
      %v1236 = vpack.c.bf16 %v1227, %v1226
      %v1237 = vpack.c.bf16 %v1229, %v1228
      %1246 = vrot.lane.b32.xlu0 %v1230, 48
      %v1247 = vpop.permute.xlu0 %1246
      %1248 = vrot.lane.b32.xlu0 %v1231, 48
      %v1249 = vpop.permute.xlu0 %1248
      %1250 = vrot.lane.b32.xlu0 %v1232, 48
      %v1251 = vpop.permute.xlu0 %1250
      %1252 = vrot.lane.b32.xlu0 %v1233, 48
      %v1253 = vpop.permute.xlu0 %1252
      %1254 = vrot.lane.b32.xlu0 %v1234, 48
      %v1255 = vpop.permute.xlu0 %1254
      %1256 = vrot.lane.b32.xlu0 %v1235, 48
      %v1257 = vpop.permute.xlu0 %1256
      %1258 = vrot.lane.b32.xlu0 %v1236, 48
      %v1259 = vpop.permute.xlu0 %1258
      %1260 = vrot.lane.b32.xlu0 %v1237, 48
      %v1261 = vpop.permute.xlu0 %1260
      %vm1270 = vcmask 425344
      %1271 = vst.msk [vmem:[#allocation3] sm:$0xff] %vm1270, %v1247
      %1272 = vst.msk [vmem:[#allocation3 + $0x8] sm:$0xff] %vm1270, %v1249
      %1273 = vst.msk [vmem:[#allocation3 + $0x10] sm:$0xff] %vm1270, %v1251
      %1274 = vst.msk [vmem:[#allocation3 + $0x18] sm:$0xff] %vm1270, %v1253
      %1275 = vst.msk [vmem:[#allocation3 + $0x20] sm:$0xff] %vm1270, %v1255
      %1276 = vst.msk [vmem:[#allocation3 + $0x28] sm:$0xff] %vm1270, %v1257
      %1277 = vst.msk [vmem:[#allocation3 + $0x30] sm:$0xff] %vm1270, %v1259
      %1278 = vst.msk [vmem:[#allocation3 + $0x38] sm:$0xff] %vm1270, %v1261
      %v1279 = vld [vmem:[%s1148 + $0x3] sm:$0xff]
      %v1280 = vld [vmem:[%s1148 + $0xb] sm:$0xff]
      %v1281 = vld [vmem:[%s1148 + $0x1b] sm:$0xff]
      %v1282 = vld [vmem:[%s1148 + $0x23] sm:$0xff]
      %v1283 = vld [vmem:[%s1148 + $0x33] sm:$0xff]
      %v1284 = vld [vmem:[%s1148 + $0x3b] sm:$0xff]
      %v1285 = vld [vmem:[%s1148 + $0x4b] sm:$0xff]
      %v1286 = vld [vmem:[%s1148 + $0x53] sm:$0xff]
      %v1287 = vld [vmem:[%s1148 + $0x63] sm:$0xff]
      %v1288 = vld [vmem:[%s1148 + $0x6b] sm:$0xff]
      %v1289 = vld [vmem:[%s1148 + $0x7b] sm:$0xff]
      %v1290 = vld [vmem:[%s1148 + $0x83] sm:$0xff]
      %v1291 = vld [vmem:[%s1148 + $0x93] sm:$0xff]
      %v1292 = vld [vmem:[%s1148 + $0x9b] sm:$0xff]
      %v1293 = vld [vmem:[%s1148 + $0xab] sm:$0xff]
      %v1294 = vld [vmem:[%s1148 + $0xb3] sm:$0xff]
      %v1295 = vpack.c.bf16 %v1280, %v1279
      %v1296 = vpack.c.bf16 %v1282, %v1281
      %v1297 = vpack.c.bf16 %v1284, %v1283
      %v1298 = vpack.c.bf16 %v1286, %v1285
      %v1299 = vpack.c.bf16 %v1288, %v1287
      %v1300 = vpack.c.bf16 %v1290, %v1289
      %v1301 = vpack.c.bf16 %v1292, %v1291
      %v1302 = vpack.c.bf16 %v1294, %v1293
      %1311 = vrot.lane.b32.xlu0 %v1295, 52
      %v1312 = vpop.permute.xlu0 %1311
      %1313 = vrot.lane.b32.xlu0 %v1296, 52
      %v1314 = vpop.permute.xlu0 %1313
      %1315 = vrot.lane.b32.xlu0 %v1297, 52
      %v1316 = vpop.permute.xlu0 %1315
      %1317 = vrot.lane.b32.xlu0 %v1298, 52
      %v1318 = vpop.permute.xlu0 %1317
      %1319 = vrot.lane.b32.xlu0 %v1299, 52
      %v1320 = vpop.permute.xlu0 %1319
      %1321 = vrot.lane.b32.xlu0 %v1300, 52
      %v1322 = vpop.permute.xlu0 %1321
      %1323 = vrot.lane.b32.xlu0 %v1301, 52
      %v1324 = vpop.permute.xlu0 %1323
      %1325 = vrot.lane.b32.xlu0 %v1302, 52
      %v1326 = vpop.permute.xlu0 %1325
      %vm1335 = vcmask 458144
      %1336 = vst.msk [vmem:[#allocation3] sm:$0xff] %vm1335, %v1312
      %1337 = vst.msk [vmem:[#allocation3 + $0x8] sm:$0xff] %vm1335, %v1314
      %1338 = vst.msk [vmem:[#allocation3 + $0x10] sm:$0xff] %vm1335, %v1316
      %1339 = vst.msk [vmem:[#allocation3 + $0x18] sm:$0xff] %vm1335, %v1318
      %1340 = vst.msk [vmem:[#allocation3 + $0x20] sm:$0xff] %vm1335, %v1320
      %1341 = vst.msk [vmem:[#allocation3 + $0x28] sm:$0xff] %vm1335, %v1322
      %1342 = vst.msk [vmem:[#allocation3 + $0x30] sm:$0xff] %vm1335, %v1324
      %1343 = vst.msk [vmem:[#allocation3 + $0x38] sm:$0xff] %vm1335, %v1326
      %s1344 = scalar_lea.vmem [#allocation2], 96
      %v1345 = vld [vmem:[%s1344] sm:$0xff]
      %v1346 = vld [vmem:[%s1344 + $0x8] sm:$0xff]
      %v1347 = vld [vmem:[%s1344 + $0x18] sm:$0xff]
      %v1348 = vld [vmem:[%s1344 + $0x20] sm:$0xff]
      %v1349 = vld [vmem:[%s1344 + $0x30] sm:$0xff]
      %v1350 = vld [vmem:[%s1344 + $0x38] sm:$0xff]
      %v1351 = vld [vmem:[%s1344 + $0x48] sm:$0xff]
      %v1352 = vld [vmem:[%s1344 + $0x50] sm:$0xff]
      %v1353 = vld [vmem:[%s1344 + $0x60] sm:$0xff]
      %v1354 = vld [vmem:[%s1344 + $0x68] sm:$0xff]
      %v1355 = vld [vmem:[%s1344 + $0x78] sm:$0xff]
      %v1356 = vld [vmem:[%s1344 + $0x80] sm:$0xff]
      %v1357 = vld [vmem:[%s1344 + $0x90] sm:$0xff]
      %v1358 = vld [vmem:[%s1344 + $0x98] sm:$0xff]
      %v1359 = vld [vmem:[%s1344 + $0xa8] sm:$0xff]
      %v1360 = vld [vmem:[%s1344 + $0xb0] sm:$0xff]
      %v1361 = vpack.c.bf16 %v1346, %v1345
      %v1362 = vpack.c.bf16 %v1348, %v1347
      %v1363 = vpack.c.bf16 %v1350, %v1349
      %v1364 = vpack.c.bf16 %v1352, %v1351
      %v1365 = vpack.c.bf16 %v1354, %v1353
      %v1366 = vpack.c.bf16 %v1356, %v1355
      %v1367 = vpack.c.bf16 %v1358, %v1357
      %v1368 = vpack.c.bf16 %v1360, %v1359
      %1377 = vrot.lane.b32.xlu0 %v1361, 56
      %v1378 = vpop.permute.xlu0 %1377
      %1379 = vrot.lane.b32.xlu0 %v1362, 56
      %v1380 = vpop.permute.xlu0 %1379
      %1381 = vrot.lane.b32.xlu0 %v1363, 56
      %v1382 = vpop.permute.xlu0 %1381
      %1383 = vrot.lane.b32.xlu0 %v1364, 56
      %v1384 = vpop.permute.xlu0 %1383
      %1385 = vrot.lane.b32.xlu0 %v1365, 56
      %v1386 = vpop.permute.xlu0 %1385
      %1387 = vrot.lane.b32.xlu0 %v1366, 56
      %v1388 = vpop.permute.xlu0 %1387
      %1389 = vrot.lane.b32.xlu0 %v1367, 56
      %v1390 = vpop.permute.xlu0 %1389
      %1391 = vrot.lane.b32.xlu0 %v1368, 56
      %v1392 = vpop.permute.xlu0 %1391
      %vm1401 = vcmask 490944
      %1402 = vst.msk [vmem:[#allocation3] sm:$0xff] %vm1401, %v1378
      %1403 = vst.msk [vmem:[#allocation3 + $0x8] sm:$0xff] %vm1401, %v1380
      %1404 = vst.msk [vmem:[#allocation3 + $0x10] sm:$0xff] %vm1401, %v1382
      %1405 = vst.msk [vmem:[#allocation3 + $0x18] sm:$0xff] %vm1401, %v1384
      %1406 = vst.msk [vmem:[#allocation3 + $0x20] sm:$0xff] %vm1401, %v1386
      %1407 = vst.msk [vmem:[#allocation3 + $0x28] sm:$0xff] %vm1401, %v1388
      %1408 = vst.msk [vmem:[#allocation3 + $0x30] sm:$0xff] %vm1401, %v1390
      %1409 = vst.msk [vmem:[#allocation3 + $0x38] sm:$0xff] %vm1401, %v1392
      %v1410 = vld [vmem:[%s1344 + $0x2] sm:$0xff]
      %v1411 = vld [vmem:[%s1344 + $0xa] sm:$0xff]
      %v1412 = vld [vmem:[%s1344 + $0x1a] sm:$0xff]
      %v1413 = vld [vmem:[%s1344 + $0x22] sm:$0xff]
      %v1414 = vld [vmem:[%s1344 + $0x32] sm:$0xff]
      %v1415 = vld [vmem:[%s1344 + $0x3a] sm:$0xff]
      %v1416 = vld [vmem:[%s1344 + $0x4a] sm:$0xff]
      %v1417 = vld [vmem:[%s1344 + $0x52] sm:$0xff]
      %v1418 = vld [vmem:[%s1344 + $0x62] sm:$0xff]
      %v1419 = vld [vmem:[%s1344 + $0x6a] sm:$0xff]
      %v1420 = vld [vmem:[%s1344 + $0x7a] sm:$0xff]
      %v1421 = vld [vmem:[%s1344 + $0x82] sm:$0xff]
      %v1422 = vld [vmem:[%s1344 + $0x92] sm:$0xff]
      %v1423 = vld [vmem:[%s1344 + $0x9a] sm:$0xff]
      %v1424 = vld [vmem:[%s1344 + $0xaa] sm:$0xff]
      %v1425 = vld [vmem:[%s1344 + $0xb2] sm:$0xff]
      %v1426 = vpack.c.bf16 %v1411, %v1410
      %v1427 = vpack.c.bf16 %v1413, %v1412
      %v1428 = vpack.c.bf16 %v1415, %v1414
      %v1429 = vpack.c.bf16 %v1417, %v1416
      %v1430 = vpack.c.bf16 %v1419, %v1418
      %v1431 = vpack.c.bf16 %v1421, %v1420
      %v1432 = vpack.c.bf16 %v1423, %v1422
      %v1433 = vpack.c.bf16 %v1425, %v1424
      %1442 = vrot.lane.b32.xlu0 %v1426, 60
      %v1443 = vpop.permute.xlu0 %1442
      %1444 = vrot.lane.b32.xlu0 %v1427, 60
      %v1445 = vpop.permute.xlu0 %1444
      %1446 = vrot.lane.b32.xlu0 %v1428, 60
      %v1447 = vpop.permute.xlu0 %1446
      %1448 = vrot.lane.b32.xlu0 %v1429, 60
      %v1449 = vpop.permute.xlu0 %1448
      %1450 = vrot.lane.b32.xlu0 %v1430, 60
      %v1451 = vpop.permute.xlu0 %1450
      %1452 = vrot.lane.b32.xlu0 %v1431, 60
      %v1453 = vpop.permute.xlu0 %1452
      %1454 = vrot.lane.b32.xlu0 %v1432, 60
      %v1455 = vpop.permute.xlu0 %1454
      %1456 = vrot.lane.b32.xlu0 %v1433, 60
      %v1457 = vpop.permute.xlu0 %1456
      %vm1466 = vcmask 523744
      %1467 = vst.msk [vmem:[#allocation3] sm:$0xff] %vm1466, %v1443
      %1468 = vst.msk [vmem:[#allocation3 + $0x8] sm:$0xff] %vm1466, %v1445
      %1469 = vst.msk [vmem:[#allocation3 + $0x10] sm:$0xff] %vm1466, %v1447
      %1470 = vst.msk [vmem:[#allocation3 + $0x18] sm:$0xff] %vm1466, %v1449
      %1471 = vst.msk [vmem:[#allocation3 + $0x20] sm:$0xff] %vm1466, %v1451
      %1472 = vst.msk [vmem:[#allocation3 + $0x28] sm:$0xff] %vm1466, %v1453
      %1473 = vst.msk [vmem:[#allocation3 + $0x30] sm:$0xff] %vm1466, %v1455
      %1474 = vst.msk [vmem:[#allocation3 + $0x38] sm:$0xff] %vm1466, %v1457
      %v1475 = vld [vmem:[%s1344 + $0x4] sm:$0xff]
      %v1476 = vld [vmem:[%s1344 + $0xc] sm:$0xff]
      %v1477 = vld [vmem:[%s1344 + $0x1c] sm:$0xff]
      %v1478 = vld [vmem:[%s1344 + $0x24] sm:$0xff]
      %v1479 = vld [vmem:[%s1344 + $0x34] sm:$0xff]
      %v1480 = vld [vmem:[%s1344 + $0x3c] sm:$0xff]
      %v1481 = vld [vmem:[%s1344 + $0x4c] sm:$0xff]
      %v1482 = vld [vmem:[%s1344 + $0x54] sm:$0xff]
      %v1483 = vld [vmem:[%s1344 + $0x64] sm:$0xff]
      %v1484 = vld [vmem:[%s1344 + $0x6c] sm:$0xff]
      %v1485 = vld [vmem:[%s1344 + $0x7c] sm:$0xff]
      %v1486 = vld [vmem:[%s1344 + $0x84] sm:$0xff]
      %v1487 = vld [vmem:[%s1344 + $0x94] sm:$0xff]
      %v1488 = vld [vmem:[%s1344 + $0x9c] sm:$0xff]
      %v1489 = vld [vmem:[%s1344 + $0xac] sm:$0xff]
      %v1490 = vld [vmem:[%s1344 + $0xb4] sm:$0xff]
      %v1491 = vpack.c.bf16 %v1476, %v1475
      %v1492 = vpack.c.bf16 %v1478, %v1477
      %v1493 = vpack.c.bf16 %v1480, %v1479
      %v1494 = vpack.c.bf16 %v1482, %v1481
      %v1495 = vpack.c.bf16 %v1484, %v1483
      %v1496 = vpack.c.bf16 %v1486, %v1485
      %v1497 = vpack.c.bf16 %v1488, %v1487
      %v1498 = vpack.c.bf16 %v1490, %v1489
      %1507 = vrot.lane.b32.xlu0 %v1491, 64
      %v1508 = vpop.permute.xlu0 %1507
      %1509 = vrot.lane.b32.xlu0 %v1492, 64
      %v1510 = vpop.permute.xlu0 %1509
      %1511 = vrot.lane.b32.xlu0 %v1493, 64
      %v1512 = vpop.permute.xlu0 %1511
      %1513 = vrot.lane.b32.xlu0 %v1494, 64
      %v1514 = vpop.permute.xlu0 %1513
      %1515 = vrot.lane.b32.xlu0 %v1495, 64
      %v1516 = vpop.permute.xlu0 %1515
      %1517 = vrot.lane.b32.xlu0 %v1496, 64
      %v1518 = vpop.permute.xlu0 %1517
      %1519 = vrot.lane.b32.xlu0 %v1497, 64
      %v1520 = vpop.permute.xlu0 %1519
      %1521 = vrot.lane.b32.xlu0 %v1498, 64
      %v1522 = vpop.permute.xlu0 %1521
      %vm1531 = vcmask 556544
      %1532 = vst.msk [vmem:[#allocation3] sm:$0xff] %vm1531, %v1508
      %1533 = vst.msk [vmem:[#allocation3 + $0x8] sm:$0xff] %vm1531, %v1510
      %1534 = vst.msk [vmem:[#allocation3 + $0x10] sm:$0xff] %vm1531, %v1512
      %1535 = vst.msk [vmem:[#allocation3 + $0x18] sm:$0xff] %vm1531, %v1514
      %1536 = vst.msk [vmem:[#allocation3 + $0x20] sm:$0xff] %vm1531, %v1516
      %1537 = vst.msk [vmem:[#allocation3 + $0x28] sm:$0xff] %vm1531, %v1518
      %1538 = vst.msk [vmem:[#allocation3 + $0x30] sm:$0xff] %vm1531, %v1520
      %1539 = vst.msk [vmem:[#allocation3 + $0x38] sm:$0xff] %vm1531, %v1522
      %v1540 = vld [vmem:[#allocation3] sm:$0xff]
      %v1541 = vld [vmem:[#allocation3 + $0x8] sm:$0xff]
      %v1542 = vld [vmem:[#allocation3 + $0x10] sm:$0xff]
      %v1543 = vld [vmem:[#allocation3 + $0x18] sm:$0xff]
      %v1544 = vld [vmem:[#allocation3 + $0x20] sm:$0xff]
      %v1545 = vld [vmem:[#allocation3 + $0x28] sm:$0xff]
      %v1546 = vld [vmem:[#allocation3 + $0x30] sm:$0xff]
      %v1547 = vld [vmem:[#allocation3 + $0x38] sm:$0xff]
      %v1548 = vld [vmem:[%s2] sm:$0xf]
      %v1549 = vld [vmem:[%s2 + $0x4] sm:$0xf]
      %v1550 = vld [vmem:[%s2 + $0x8] sm:$0xf]
      %v1551 = vld [vmem:[%s2 + $0xc] sm:$0xf]
      %v1552 = vld [vmem:[%s2 + $0x10] sm:$0xf]
      %v1553 = vld [vmem:[%s2 + $0x14] sm:$0xf]
      %v1554 = vld [vmem:[%s2 + $0x18] sm:$0xf]
      %v1555 = vld [vmem:[%s2 + $0x1c] sm:$0xf]
      %v1556 = vld [vmem:[%s2 + $0x20] sm:$0x3]
      %v1557 = vld [vmem:[%s3] sm:$0x1]
      %v1559 = vlaneseq
      %v1560 = vshrl.u32 %v1559, 7
      %v1561 = vsub.s32 0, %v1560
      %v1562 = vrot.slane %v1557, %v1561
      %v1573 = vunpack.c.l.b16 %v1548
      %v1574 = vunpack.c.l.b16 %v1549
      %v1575 = vunpack.c.l.b16 %v1550
      %v1576 = vunpack.c.l.b16 %v1551
      %v1577 = vunpack.c.l.b16 %v1552
      %v1578 = vunpack.c.l.b16 %v1553
      %v1579 = vunpack.c.l.b16 %v1554
      %v1580 = vunpack.c.l.b16 %v1555
      %v1581 = vunpack.c.l.b16 %v1556
      %v1582 = vpack.c.b16 %v1574, %v1573
      %v1583 = vpack.c.b16 %v1576, %v1575
      %v1584 = vpack.c.b16 %v1578, %v1577
      %v1585 = vpack.c.b16 %v1580, %v1579
      %v1586 = vpack.c.b16 %v1581, %v1581
      %vm1591 = vcmask 556032
      %v1593 = vsel %vm1591, %v1540, 0
      %v1596 = vsel %vm1591, %v1541, 0
      %v1599 = vsel %vm1591, %v1542, 0
      %v1602 = vsel %vm1591, %v1543, 0
      %v1605 = vsel %vm1591, %v1544, 0
      %v1608 = vsel %vm1591, %v1545, 0
      %v1611 = vsel %vm1591, %v1546, 0
      %v1614 = vsel %vm1591, %v1547, 0
      %vm1616 = vcmask 1041408
      %v1618 = vsel %vm1616, %v1586, 0
      %1620 = vmatprep.subr.bf16.mxu0 0
      %1621 = vmatpush1.bf16.msra.mxu0 %v1582
      %1622 = vmatprep.subr.bf16.mxu0 0
      %1623 = vmatpush1.bf16.msra.mxu0 %v1583
      %1624 = vmatprep.subr.bf16.mxu0 0
      %1625 = vmatpush1.bf16.msra.mxu0 %v1584
      %1626 = vmatprep.subr.bf16.mxu0 0
      %1627 = vmatpush1.bf16.msra.mxu0 %v1585
      %1628 = vmatprep.subr.bf16.mxu0 0
      %1629 = vmatpush1.bf16.msra.mxu0 %v1618
      %1630 = vmatprep.subr.bf16.mxu0 0
      %1631 = vmatpush1.bf16.msra.mxu0 0
      %1632 = vmatprep.subr.bf16.mxu0 0
      %1633 = vmatpush1.bf16.msra.mxu0 0
      %1634 = vmatprep.subr.bf16.mxu0 0
      %1635 = vmatpush1.bf16.msra.mxu0 0
      %1636 = vmatprep.subr.bf16.mxu0 0
      %1637 = vmatpush1.bf16.msra.mxu0 0
      %1638 = vmatprep.subr.bf16.mxu0 0
      %1639 = vmatpush1.bf16.msra.mxu0 0
      %1640 = vmatprep.subr.bf16.mxu0 0
      %1641 = vmatpush1.bf16.msra.mxu0 0
      %1642 = vmatprep.subr.bf16.mxu0 0
      %1643 = vmatpush1.bf16.msra.mxu0 0
      %1644 = vmatprep.subr.bf16.mxu0 0
      %1645 = vmatpush1.bf16.msra.mxu0 0
      %1646 = vmatprep.subr.bf16.mxu0 0
      %1647 = vmatpush1.bf16.msra.mxu0 0
      %1648 = vmatprep.subr.bf16.mxu0 0
      %1649 = vmatpush1.bf16.msra.mxu0 0
      %1650 = vmatprep.subr.bf16.mxu0 0
      %1651 = vmatpush1.bf16.msra.mxu0 0
      %1652 = vmatprep.mubr.bf16.mxu0 0
      %1653 = vmatmul.mubr.bf16.gmra.mrb[0].mxu0 %v1593
      %v1654 = vpop.f32.mrb[0].mxu0
      %v1655 = vadd.f32 %v1562, %v1654
      %v1656 = vpop.f32.mrb[0].mxu0
      %v1657 = vpop.f32.mrb[0].mxu0
      %v1658 = vadd.f32 %v1562, %v1657
      %v1659 = vpop.f32.mrb[0].mxu0
      %1660 = vmatprep.mubr.bf16.mxu0 0
      %1661 = vmatmul.mubr.bf16.gmra.mrb[0].mxu0 %v1596
      %v1662 = vpop.f32.mrb[0].mxu0
      %v1663 = vadd.f32 %v1562, %v1662
      %v1664 = vpop.f32.mrb[0].mxu0
      %v1665 = vpop.f32.mrb[0].mxu0
      %v1666 = vadd.f32 %v1562, %v1665
      %v1667 = vpop.f32.mrb[0].mxu0
      %1668 = vmatprep.mubr.bf16.mxu0 0
      %1669 = vmatmul.mubr.bf16.gmra.mrb[0].mxu0 %v1599
      %v1670 = vpop.f32.mrb[0].mxu0
      %v1671 = vadd.f32 %v1562, %v1670
      %v1672 = vpop.f32.mrb[0].mxu0
      %v1673 = vpop.f32.mrb[0].mxu0
      %v1674 = vadd.f32 %v1562, %v1673
      %v1675 = vpop.f32.mrb[0].mxu0
      %1676 = vmatprep.mubr.bf16.mxu0 0
      %1677 = vmatmul.mubr.bf16.gmra.mrb[0].mxu0 %v1602
      %v1678 = vpop.f32.mrb[0].mxu0
      %v1679 = vadd.f32 %v1562, %v1678
      %v1680 = vpop.f32.mrb[0].mxu0
      %v1681 = vpop.f32.mrb[0].mxu0
      %v1682 = vadd.f32 %v1562, %v1681
      %v1683 = vpop.f32.mrb[0].mxu0
      %1684 = vmatprep.mubr.bf16.mxu0 0
      %1685 = vmatmul.mubr.bf16.gmra.mrb[0].mxu0 %v1605
      %v1686 = vpop.f32.mrb[0].mxu0
      %v1687 = vadd.f32 %v1562, %v1686
      %v1688 = vpop.f32.mrb[0].mxu0
      %v1689 = vpop.f32.mrb[0].mxu0
      %v1690 = vadd.f32 %v1562, %v1689
      %v1691 = vpop.f32.mrb[0].mxu0
      %1692 = vmatprep.mubr.bf16.mxu0 0
      %1693 = vmatmul.mubr.bf16.gmra.mrb[0].mxu0 %v1608
      %v1694 = vpop.f32.mrb[0].mxu0
      %v1695 = vadd.f32 %v1562, %v1694
      %v1696 = vpop.f32.mrb[0].mxu0
      %v1697 = vpop.f32.mrb[0].mxu0
      %v1698 = vadd.f32 %v1562, %v1697
      %v1699 = vpop.f32.mrb[0].mxu0
      %1700 = vmatprep.mubr.bf16.mxu0 0
      %1701 = vmatmul.mubr.bf16.gmra.mrb[0].mxu0 %v1611
      %v1702 = vpop.f32.mrb[0].mxu0
      %v1703 = vadd.f32 %v1562, %v1702
      %v1704 = vpop.f32.mrb[0].mxu0
      %v1705 = vpop.f32.mrb[0].mxu0
      %v1706 = vadd.f32 %v1562, %v1705
      %v1707 = vpop.f32.mrb[0].mxu0
      %1708 = vmatprep.mubr.bf16.mxu0 0
      %1709 = vmatmul.mubr.bf16.gmra.mrb[0].mxu0 %v1614
      %v1710 = vpop.f32.mrb[0].mxu0
      %v1711 = vadd.f32 %v1562, %v1710
      %v1712 = vpop.f32.mrb[0].mxu0
      %v1713 = vpop.f32.mrb[0].mxu0
      %v1714 = vadd.f32 %v1562, %v1713
      %v1715 = vpop.f32.mrb[0].mxu0
      %1716 = vdwg.mxu0
      %v1717 = vmax.f32 %v1655, 0.0
      %v1718 = vmax.f32 %v1658, 0.0
      %v1719 = vmax.f32 %v1663, 0.0
      %v1720 = vmax.f32 %v1666, 0.0
      %v1721 = vmax.f32 %v1671, 0.0
      %v1722 = vmax.f32 %v1674, 0.0
      %v1723 = vmax.f32 %v1679, 0.0
      %v1724 = vmax.f32 %v1682, 0.0
      %v1725 = vmax.f32 %v1687, 0.0
      %v1726 = vmax.f32 %v1690, 0.0
      %v1727 = vmax.f32 %v1695, 0.0
      %v1728 = vmax.f32 %v1698, 0.0
      %v1729 = vmax.f32 %v1703, 0.0
      %v1730 = vmax.f32 %v1706, 0.0
      %v1731 = vmax.f32 %v1711, 0.0
      %v1732 = vmax.f32 %v1714, 0.0
      %v1733 = vpack.c.bf16 %v1718, %v1717
      %v1734 = vpack.c.bf16 %v1720, %v1719
      %v1735 = vpack.c.bf16 %v1722, %v1721
      %v1736 = vpack.c.bf16 %v1724, %v1723
      %v1737 = vpack.c.bf16 %v1726, %v1725
      %v1738 = vpack.c.bf16 %v1728, %v1727
      %v1739 = vpack.c.bf16 %v1730, %v1729
      %v1740 = vpack.c.bf16 %v1732, %v1731
      %v1741 = vld [vmem:[%s4] sm:$0xf]
      %v1742 = vld [vmem:[%s4 + $0x4] sm:$0x3]
      %v1743 = vld [vmem:[%s5] sm:$0x1]
      %v1745 = vlaneseq
      %v1746 = vshrl.u32 %v1745, 7
      %v1747 = vsub.s32 0, %v1746
      %v1748 = vrot.slane %v1743, %v1747
      %v1752 = vunpack.c.l.b16 %v1741
      %v1753 = vunpack.c.l.b16 %v1742
      %v1754 = vpack.c.b16 %v1753, %v1752
      %vm1755 = vcmask 97280
      %v1757 = vsel %vm1755, %v1733, 0
      %v1760 = vsel %vm1755, %v1734, 0
      %v1763 = vsel %vm1755, %v1735, 0
      %v1766 = vsel %vm1755, %v1736, 0
      %v1769 = vsel %vm1755, %v1737, 0
      %v1772 = vsel %vm1755, %v1738, 0
      %v1775 = vsel %vm1755, %v1739, 0
      %v1778 = vsel %vm1755, %v1740, 0
      %vm1780 = vcmask 1045504
      %v1782 = vsel %vm1780, %v1754, 0
      %1784 = vmatprep.subr.bf16.mxu0 0
      %1785 = vmatpush1.bf16.msra.mxu0 %v1782
      %1786 = vmatprep.subr.bf16.mxu0 0
      %1787 = vmatpush1.bf16.msra.mxu0 0
      %1788 = vmatprep.subr.bf16.mxu0 0
      %1789 = vmatpush1.bf16.msra.mxu0 0
      %1790 = vmatprep.subr.bf16.mxu0 0
      %1791 = vmatpush1.bf16.msra.mxu0 0
      %1792 = vmatprep.subr.bf16.mxu0 0
      %1793 = vmatpush1.bf16.msra.mxu0 0
      %1794 = vmatprep.subr.bf16.mxu0 0
      %1795 = vmatpush1.bf16.msra.mxu0 0
      %1796 = vmatprep.subr.bf16.mxu0 0
      %1797 = vmatpush1.bf16.msra.mxu0 0
      %1798 = vmatprep.subr.bf16.mxu0 0
      %1799 = vmatpush1.bf16.msra.mxu0 0
      %1800 = vmatprep.subr.bf16.mxu0 0
      %1801 = vmatpush1.bf16.msra.mxu0 0
      %1802 = vmatprep.subr.bf16.mxu0 0
      %1803 = vmatpush1.bf16.msra.mxu0 0
      %1804 = vmatprep.subr.bf16.mxu0 0
      %1805 = vmatpush1.bf16.msra.mxu0 0
      %1806 = vmatprep.subr.bf16.mxu0 0
      %1807 = vmatpush1.bf16.msra.mxu0 0
      %1808 = vmatprep.subr.bf16.mxu0 0
      %1809 = vmatpush1.bf16.msra.mxu0 0
      %1810 = vmatprep.subr.bf16.mxu0 0
      %1811 = vmatpush1.bf16.msra.mxu0 0
      %1812 = vmatprep.subr.bf16.mxu0 0
      %1813 = vmatpush1.bf16.msra.mxu0 0
      %1814 = vmatprep.subr.bf16.mxu0 0
      %1815 = vmatpush1.bf16.msra.mxu0 0
      %1816 = vmatprep.mubr.bf16.mxu0 0
      %1817 = vmatmul.mubr.bf16.gmra.mrb[0].mxu0 %v1757
      %v1818 = vpop.f32.mrb[0].mxu0
      %v1819 = vadd.f32 %v1748, %v1818
      %v1820 = vpop.f32.mrb[0].mxu0
      %v1821 = vpop.f32.mrb[0].mxu0
      %v1822 = vadd.f32 %v1748, %v1821
      %v1823 = vpop.f32.mrb[0].mxu0
      %1824 = vmatprep.mubr.bf16.mxu0 0
      %1825 = vmatmul.mubr.bf16.gmra.mrb[0].mxu0 %v1760
      %v1826 = vpop.f32.mrb[0].mxu0
      %v1827 = vadd.f32 %v1748, %v1826
      %v1828 = vpop.f32.mrb[0].mxu0
      %v1829 = vpop.f32.mrb[0].mxu0
      %v1830 = vadd.f32 %v1748, %v1829
      %v1831 = vpop.f32.mrb[0].mxu0
      %1832 = vmatprep.mubr.bf16.mxu0 0
      %1833 = vmatmul.mubr.bf16.gmra.mrb[0].mxu0 %v1763
      %v1834 = vpop.f32.mrb[0].mxu0
      %v1835 = vadd.f32 %v1748, %v1834
      %v1836 = vpop.f32.mrb[0].mxu0
      %v1837 = vpop.f32.mrb[0].mxu0
      %v1838 = vadd.f32 %v1748, %v1837
      %v1839 = vpop.f32.mrb[0].mxu0
      %1840 = vmatprep.mubr.bf16.mxu0 0
      %1841 = vmatmul.mubr.bf16.gmra.mrb[0].mxu0 %v1766
      %v1842 = vpop.f32.mrb[0].mxu0
      %v1843 = vadd.f32 %v1748, %v1842
      %v1844 = vpop.f32.mrb[0].mxu0
      %v1845 = vpop.f32.mrb[0].mxu0
      %v1846 = vadd.f32 %v1748, %v1845
      %v1847 = vpop.f32.mrb[0].mxu0
      %1848 = vmatprep.mubr.bf16.mxu0 0
      %1849 = vmatmul.mubr.bf16.gmra.mrb[0].mxu0 %v1769
      %v1850 = vpop.f32.mrb[0].mxu0
      %v1851 = vadd.f32 %v1748, %v1850
      %v1852 = vpop.f32.mrb[0].mxu0
      %v1853 = vpop.f32.mrb[0].mxu0
      %v1854 = vadd.f32 %v1748, %v1853
      %v1855 = vpop.f32.mrb[0].mxu0
      %1856 = vmatprep.mubr.bf16.mxu0 0
      %1857 = vmatmul.mubr.bf16.gmra.mrb[0].mxu0 %v1772
      %v1858 = vpop.f32.mrb[0].mxu0
      %v1859 = vadd.f32 %v1748, %v1858
      %v1860 = vpop.f32.mrb[0].mxu0
      %v1861 = vpop.f32.mrb[0].mxu0
      %v1862 = vadd.f32 %v1748, %v1861
      %v1863 = vpop.f32.mrb[0].mxu0
      %1864 = vmatprep.mubr.bf16.mxu0 0
      %1865 = vmatmul.mubr.bf16.gmra.mrb[0].mxu0 %v1775
      %v1866 = vpop.f32.mrb[0].mxu0
      %v1867 = vadd.f32 %v1748, %v1866
      %v1868 = vpop.f32.mrb[0].mxu0
      %v1869 = vpop.f32.mrb[0].mxu0
      %v1870 = vadd.f32 %v1748, %v1869
      %v1871 = vpop.f32.mrb[0].mxu0
      %1872 = vmatprep.mubr.bf16.mxu0 0
      %1873 = vmatmul.mubr.bf16.gmra.mrb[0].mxu0 %v1778
      %v1874 = vpop.f32.mrb[0].mxu0
      %v1875 = vadd.f32 %v1748, %v1874
      %v1876 = vpop.f32.mrb[0].mxu0
      %v1877 = vpop.f32.mrb[0].mxu0
      %v1878 = vadd.f32 %v1748, %v1877
      %v1879 = vpop.f32.mrb[0].mxu0
      %1880 = vdwg.mxu0
      %v1881 = vsub.f32 0.0, %v1819
      %v1882 = vsub.f32 0.0, %v1822
      %v1883 = vsub.f32 0.0, %v1827
      %v1884 = vsub.f32 0.0, %v1830
      %v1885 = vsub.f32 0.0, %v1835
      %v1886 = vsub.f32 0.0, %v1838
      %v1887 = vsub.f32 0.0, %v1843
      %v1888 = vsub.f32 0.0, %v1846
      %v1889 = vsub.f32 0.0, %v1851
      %v1890 = vsub.f32 0.0, %v1854
      %v1891 = vsub.f32 0.0, %v1859
      %v1892 = vsub.f32 0.0, %v1862
      %v1893 = vsub.f32 0.0, %v1867
      %v1894 = vsub.f32 0.0, %v1870
      %v1895 = vsub.f32 0.0, %v1875
      %v1896 = vsub.f32 0.0, %v1878
      %v1897 = vmul.f32 %v1881, 1.442695
      %v1898 = vpow.pop %v1897
      %v1899 = vmul.f32 %v1882, 1.442695
      %v1900 = vpow.pop %v1899
      %v1901 = vmul.f32 %v1883, 1.442695
      %v1902 = vpow.pop %v1901
      %v1903 = vmul.f32 %v1884, 1.442695
      %v1904 = vpow.pop %v1903
      %v1905 = vmul.f32 %v1885, 1.442695
      %v1906 = vpow.pop %v1905
      %v1907 = vmul.f32 %v1886, 1.442695
      %v1908 = vpow.pop %v1907
      %v1909 = vmul.f32 %v1887, 1.442695
      %v1910 = vpow.pop %v1909
      %v1911 = vmul.f32 %v1888, 1.442695
      %v1912 = vpow.pop %v1911
      %v1913 = vmul.f32 %v1889, 1.442695
      %v1914 = vpow.pop %v1913
      %v1915 = vmul.f32 %v1890, 1.442695
      %v1916 = vpow.pop %v1915
      %v1917 = vmul.f32 %v1891, 1.442695
      %v1918 = vpow.pop %v1917
      %v1919 = vmul.f32 %v1892, 1.442695
      %v1920 = vpow.pop %v1919
      %v1921 = vmul.f32 %v1893, 1.442695
      %v1922 = vpow.pop %v1921
      %v1923 = vmul.f32 %v1894, 1.442695
      %v1924 = vpow.pop %v1923
      %v1925 = vmul.f32 %v1895, 1.442695
      %v1926 = vpow.pop %v1925
      %v1927 = vmul.f32 %v1896, 1.442695
      %v1928 = vpow.pop %v1927
      %v1929 = vadd.f32 %v1898, 1.0
      %v1930 = vadd.f32 %v1900, 1.0
      %v1931 = vadd.f32 %v1902, 1.0
      %v1932 = vadd.f32 %v1904, 1.0
      %v1933 = vadd.f32 %v1906, 1.0
      %v1934 = vadd.f32 %v1908, 1.0
      %v1935 = vadd.f32 %v1910, 1.0
      %v1936 = vadd.f32 %v1912, 1.0
      %v1937 = vadd.f32 %v1914, 1.0
      %v1938 = vadd.f32 %v1916, 1.0
      %v1939 = vadd.f32 %v1918, 1.0
      %v1940 = vadd.f32 %v1920, 1.0
      %v1941 = vadd.f32 %v1922, 1.0
      %v1942 = vadd.f32 %v1924, 1.0
      %v1943 = vadd.f32 %v1926, 1.0
      %v1944 = vadd.f32 %v1928, 1.0
      %v1945 = vrcp.pop %v1929
      %v1946 = vrcp.pop %v1930
      %v1947 = vrcp.pop %v1931
      %v1948 = vrcp.pop %v1932
      %v1949 = vrcp.pop %v1933
      %v1950 = vrcp.pop %v1934
      %v1951 = vrcp.pop %v1935
      %v1952 = vrcp.pop %v1936
      %v1953 = vrcp.pop %v1937
      %v1954 = vrcp.pop %v1938
      %v1955 = vrcp.pop %v1939
      %v1956 = vrcp.pop %v1940
      %v1957 = vrcp.pop %v1941
      %v1958 = vrcp.pop %v1942
      %v1959 = vrcp.pop %v1943
      %v1960 = vrcp.pop %v1944
      %v1961 = vadd.f32 %v1945, 1.0
      %v1962 = vadd.f32 %v1946, 1.0
      %v1963 = vadd.f32 %v1947, 1.0
      %v1964 = vadd.f32 %v1948, 1.0
      %v1965 = vadd.f32 %v1949, 1.0
      %v1966 = vadd.f32 %v1950, 1.0
      %v1967 = vadd.f32 %v1951, 1.0
      %v1968 = vadd.f32 %v1952, 1.0
      %v1969 = vadd.f32 %v1953, 1.0
      %v1970 = vadd.f32 %v1954, 1.0
      %v1971 = vadd.f32 %v1955, 1.0
      %v1972 = vadd.f32 %v1956, 1.0
      %v1973 = vadd.f32 %v1957, 1.0
      %v1974 = vadd.f32 %v1958, 1.0
      %v1975 = vadd.f32 %v1959, 1.0
      %v1976 = vadd.f32 %v1960, 1.0
      %v1977 = vmul.f32 %v449, %v1961
      %v1978 = vmul.f32 %v450, %v1962
      %v1979 = vmul.f32 %v451, %v1963
      %v1980 = vmul.f32 %v452, %v1964
      %v1981 = vmul.f32 %v453, %v1965
      %v1982 = vmul.f32 %v454, %v1966
      %v1983 = vmul.f32 %v455, %v1967
      %v1984 = vmul.f32 %v456, %v1968
      %v1985 = vmul.f32 %v457, %v1969
      %v1986 = vmul.f32 %v458, %v1970
      %v1987 = vmul.f32 %v459, %v1971
      %v1988 = vmul.f32 %v460, %v1972
      %v1989 = vmul.f32 %v461, %v1973
      %v1990 = vmul.f32 %v462, %v1974
      %v1991 = vmul.f32 %v463, %v1975
      %v1992 = vmul.f32 %v464, %v1976
      %1993 = vst.msk [vmem:[%s370] sm:$0xff] %vm397, %v1977
      %1994 = vst.msk [vmem:[%s370 + $0x8] sm:$0xff] %vm397, %v1978
      %1995 = vst.msk [vmem:[%s370 + $0x10] sm:$0xff] %vm397, %v1979
      %1996 = vst.msk [vmem:[%s370 + $0x18] sm:$0xff] %vm397, %v1980
      %1997 = vst.msk [vmem:[%s370 + $0x20] sm:$0xff] %vm397, %v1981
      %1998 = vst.msk [vmem:[%s370 + $0x28] sm:$0xff] %vm397, %v1982
      %1999 = vst.msk [vmem:[%s370 + $0x30] sm:$0xff] %vm397, %v1983
      %2000 = vst.msk [vmem:[%s370 + $0x38] sm:$0xff] %vm397, %v1984
      %2001 = vst.msk [vmem:[%s370 + $0x40] sm:$0xff] %vm397, %v1985
      %2002 = vst.msk [vmem:[%s370 + $0x48] sm:$0xff] %vm397, %v1986
      %2003 = vst.msk [vmem:[%s370 + $0x50] sm:$0xff] %vm397, %v1987
      %2004 = vst.msk [vmem:[%s370 + $0x58] sm:$0xff] %vm397, %v1988
      %2005 = vst.msk [vmem:[%s370 + $0x60] sm:$0xff] %vm397, %v1989
      %2006 = vst.msk [vmem:[%s370 + $0x68] sm:$0xff] %vm397, %v1990
      %2007 = vst.msk [vmem:[%s370 + $0x70] sm:$0xff] %vm397, %v1991
      %2008 = vst.msk [vmem:[%s370 + $0x78] sm:$0xff] %vm397, %v1992
      %s2009 = smul.u32 16, %s22
      %p2010 = scmp.lt.s32.totalorder %s21, 1
      %s2011 = scalar_select %p2010, %s21, 1
      %p2012 = scmp.lt.s32.totalorder %s2009, 31
      %s2013 = scalar_select %p2012, %s2009, 31
      %s2014 = smul.addr %s2011, 32
      %s2015 = sadd.s32 %s2013, %s2014
      %s2016 = smul.addr %s2015, 8
      %s2017 = scalar_lea.vmem %s6, %s2016
      // Predicated region
      $region45: #{msag_forward.1} parent=43 // pred_check
        %p2018 = pneg %p193
      $region46: #{msag_forward.1} parent=43 // pred_check_branch
        %2020 = sbr.rel (%p2018) target = $region48
      $region47: #{msag_forward.1} parent=43 // pred_region
        %s2021 = smul.u32 16, %s22
      $region48: #{msag_forward.1} parent=43 // pred_fallthru
        _
    $region44: #{msag_forward.1} parent=5 // pred_fallthru
      _
    %p2022 = scmp.le.s32.totalorder 2, %s12
    // Predicated region
    $region49: #{msag_forward.1} parent=5 // pred_check
      %p2023 = pneg %p2022
    $region50: #{msag_forward.1} parent=5 // pred_check_branch
      %2025 = sbr.rel (%p2023) target = $region52
    $region51: #{msag_forward.1} parent=5 // pred_region
      %s2026 = ssub.s32 %s12, 2
      // Predicated region
      $region53: #{msag_forward.1} parent=51 // pred_check
        %p2027 = pneg %p199
      $region54: #{msag_forward.1} parent=51 // pred_check_branch
        %2029 = sbr.rel (%p2027) target = $region56
      $region55: #{msag_forward.1} parent=51 // pred_region
        %s2030 = smul.u32 16, %s24
        %p2031 = scmp.lt.s32.totalorder %s23, 1
        %s2032 = scalar_select %p2031, %s23, 1
        %p2033 = scmp.lt.s32.totalorder %s2030, 31
        %s2034 = scalar_select %p2033, %s2030, 31
        %s2035 = smul.addr %s2032, 32
        %s2036 = sadd.s32 %s2034, %s2035
        %s2037 = smul.addr %s2036, 8
        %s2038 = scalar_lea.vmem %s6, %s2037
      $region56: #{msag_forward.1} parent=51 // pred_fallthru
        _
    $region52: #{msag_forward.1} parent=5 // pred_fallthru
      _
  $region6: #{msag_forward.1} parent=0 // loop_footer
    %s16 = sadd.s32 1, %s12
  $region7: #{msag_forward.1} parent=0 // loop_footer_branch
    %11 = sbr.rel target = $region3
  $region8: #{msag_forward.1} parent=0 // loop_exit
    _

</llo_original>
